<compile_context>
chip_gen: v7x
topology: tpu7x:2x2x1
jax: 0.10.0
libtpu: 0.0.40
codegen_flags: <defaults>
</compile_context>

<pallas_src>
import jax
import jax.numpy as jnp
from jax.experimental import pallas as pl
from jax.experimental.pallas import tpu as pltpu

OUT_CHANNEL = 5                # CNN out_channel
INPUT_SIZE_GNN = 5             # fc2 out / gnn1 in
HID1 = 20                      # fc1 out / gnn1 out
KSIZE = 24                     # Conv1d kernel size (== window length -> conv output length 1)
F_RAW = 12 + 4 * KSIZE         # 108 features consumed by the forward pass
F_CAT = 12 + 4 * OUT_CHANNEL   # 32 = fc1 input width in the PyTorch model
F_PAD = 128                    # lane-aligned padded feature width
WX_COLS = 256                  # fused front-end weight width (conv block @ 0, fc1-raw block @ 128)


def _forward_kernel(x_ref, wx_ref, bc_ref, w1b_ref, b1_ref, w2_ref, b2_ref,
                    a_ref, g1l_ref, g1r_ref, g1b_ref, g2l_ref, g2r_ref, g2b_ref,
                    out_ref):
    xin = x_ref[0]                                                           # (N, 128)

    # --- Single fused MXU pass over the padded input slab:
    #     cols [0:20]    = 4x Conv1d fused as a block-diagonal matmul (pre-activation)
    #     cols [128:148] = fc1 applied to the raw 12 features (no concat needed)
    y = jnp.dot(xin, wx_ref[...], preferred_element_type=jnp.float32)       # (N, 256)

    conv = jnp.maximum(y[:, :4 * OUT_CHANNEL] + bc_ref[...], 0.0)           # (N, 20)

    # --- fc1: raw-feature partial result + conv-output partial matmul, then ReLU.
    h = jnp.maximum(
        y[:, 128:128 + HID1]
        + jnp.dot(conv, w1b_ref[...], preferred_element_type=jnp.float32)
        + b1_ref[...], 0.0)                                                 # (N, 20)

    # --- fc2 (no activation afterwards in the PyTorch model).
    h = jnp.dot(h, w2_ref[...], preferred_element_type=jnp.float32) + b2_ref[...]   # (N, 5)

    # --- SAGEConv 1: mean aggregation as a row-normalized adjacency matmul.
    A = a_ref[...]                                                           # (N, N)
    agg1 = jnp.dot(A, h, preferred_element_type=jnp.float32)
    o1 = (jnp.dot(agg1, g1l_ref[...], preferred_element_type=jnp.float32)
          + g1b_ref[...]
          + jnp.dot(h, g1r_ref[...], preferred_element_type=jnp.float32))    # (N, 20)

    # --- SAGEConv 2.
    agg2 = jnp.dot(A, o1, preferred_element_type=jnp.float32)
    o2 = (jnp.dot(agg2, g2l_ref[...], preferred_element_type=jnp.float32)
          + g2b_ref[...]
          + jnp.dot(o1, g2r_ref[...], preferred_element_type=jnp.float32))   # (N, 1)

    # Lane-dense store: block is (1, 1, N) with nodes on the lane dim (PyTorch layout).
    out_ref[...] = jnp.transpose(o2)[None, :, :]


def init_params(key):
    """Deterministic parameter init (PyTorch-style uniform(-1/sqrt(fan_in), 1/sqrt(fan_in)))."""
    ks = jax.random.split(key, 12)

    def unif(k, shape, fan_in):
        bound = 1.0 / float(fan_in) ** 0.5
        return jax.random.uniform(k, shape, jnp.float32, -bound, bound)

    return {
        # 4 CNN branches stacked (t, r, tp, ssr): Conv1d weight (OC, 1, 24) squeezed to (OC, 24)
        "conv_w": unif(ks[0], (4, OUT_CHANNEL, KSIZE), KSIZE),
        "conv_b": unif(ks[1], (4, OUT_CHANNEL), KSIZE),
        "fc1_w": unif(ks[2], (HID1, F_CAT), F_CAT),
        "fc1_b": unif(ks[3], (HID1,), F_CAT),
        "fc2_w": unif(ks[4], (INPUT_SIZE_GNN, HID1), HID1),
        "fc2_b": unif(ks[5], (INPUT_SIZE_GNN,), HID1),
        # SAGEConv gnn1: lin_l (with bias) + lin_r (no bias)
        "g1_lw": unif(ks[6], (HID1, INPUT_SIZE_GNN), INPUT_SIZE_GNN),
        "g1_lb": unif(ks[7], (HID1,), INPUT_SIZE_GNN),
        "g1_rw": unif(ks[8], (HID1, INPUT_SIZE_GNN), INPUT_SIZE_GNN),
        # SAGEConv gnn2
        "g2_lw": unif(ks[9], (1, HID1), HID1),
        "g2_lb": unif(ks[10], (1,), HID1),
        "g2_rw": unif(ks[11], (1, HID1), HID1),
    }


def _mean_adjacency(edge_index, N):
    """Dense A with A[i, j] = (#edges j->i) / max(#in-edges of i, 1) — PyG scatter-mean."""
    src = edge_index[0]
    dst = edge_index[1]
    A = jnp.zeros((N, N), jnp.float32).at[dst, src].add(jnp.ones(src.shape, jnp.float32))
    deg = jnp.maximum(jnp.sum(A, axis=1, keepdims=True), 1.0)
    return A / deg


def _prep_weights(params):
    """Glue-side weight packing: fused (conv block-diag | fc1-raw) MXU weight, pre-transposed rest."""
    # Fused front-end weight on the 128-lane padded slab.
    wx = jnp.zeros((F_PAD, WX_COLS), jnp.float32)
    for k in range(4):                      # conv block-diagonal part -> output cols [0:20]
        wx = wx.at[12 + KSIZE * k:12 + KSIZE * (k + 1),
                   OUT_CHANNEL * k:OUT_CHANNEL * (k + 1)].set(params["conv_w"][k].T)
    w1 = params["fc1_w"].T                  # (32, 20)
    wx = wx.at[:12, 128:128 + HID1].set(w1[:12, :])   # fc1 raw-12 part -> output cols [128:148]

    bconv = params["conv_b"].reshape(1, 4 * OUT_CHANNEL)   # (1, 20), branch order t,r,tp,ssr
    w1b = w1[12:, :]                                        # (20, 20) conv-output part of fc1
    b1 = params["fc1_b"].reshape(1, HID1)
    w2 = params["fc2_w"].T                                  # (20, 5)
    b2 = params["fc2_b"].reshape(1, INPUT_SIZE_GNN)
    g1l = params["g1_lw"].T                                 # (5, 20)
    g1r = params["g1_rw"].T                                 # (5, 20)
    g1b = params["g1_lb"].reshape(1, HID1)
    g2l = params["g2_lw"].T                                 # (20, 1)
    g2r = params["g2_rw"].T                                 # (20, 1)
    g2b = params["g2_lb"].reshape(1, 1)
    return wx, bconv, w1b, b1, w2, b2, g1l, g1r, g1b, g2l, g2r, g2b


def _const_spec(arr):
    """Full-array block with a constant index map: stays VMEM-resident across the grid."""
    zeros = (0,) * arr.ndim
    return pl.BlockSpec(arr.shape, lambda b: zeros)


def cnn_fc_graphsage_forward(x, edge_index, params):
    B, S, N, F = x.shape
    assert S == 1, "Conv1d(in_channels=1) in the PyTorch model requires S == 1"
    assert F >= F_RAW

    # (B, 1, N, F) -> lane-padded (B, N, 128) f32 slab (features on the lane dim).
    xf = x[:, 0, :, :F_RAW].astype(jnp.float32)
    x_pad = jnp.zeros((B, N, F_PAD), jnp.float32).at[:, :, :F_RAW].set(xf)

    A = _mean_adjacency(edge_index, N)

    (wx, bconv, w1b, b1, w2, b2,
     g1l, g1r, g1b, g2l, g2r, g2b) = _prep_weights(params)

    out = pl.pallas_call(
        _forward_kernel,
        out_shape=jax.ShapeDtypeStruct((B, 1, N), jnp.float32),
        grid=(B,),
        in_specs=[
            pl.BlockSpec((1, N, F_PAD), lambda b: (b, 0, 0)),     # per-batch activation tile
            _const_spec(wx), _const_spec(bconv),
            _const_spec(w1b), _const_spec(b1),
            _const_spec(w2), _const_spec(b2),
            _const_spec(A),
            _const_spec(g1l), _const_spec(g1r), _const_spec(g1b),
            _const_spec(g2l), _const_spec(g2r), _const_spec(g2b),
        ],
        out_specs=pl.BlockSpec((1, 1, N), lambda b: (b, 0, 0)),
        compiler_params=pltpu.CompilerParams(
            dimension_semantics=("parallel",)),                   # megacore over B on v7x
    )(x_pad, wx, bconv, w1b, b1, w2, b2, A,
      g1l, g1r, g1b, g2l, g2r, g2b)

    return out                                                    # (B, 1, N) — PyTorch layout


def reference_forward(x, edge_index, params):
    """Pure-JAX reference with identical semantics (for correctness checking)."""
    B, S, N, F = x.shape
    xf = x[:, 0, :, :F_RAW].astype(jnp.float32)                   # (B, N, 108)
    parts = [xf[..., :12]]
    for k in range(4):
        sl = xf[..., 12 + KSIZE * k:12 + KSIZE * (k + 1)]
        parts.append(jnp.maximum(
            jnp.einsum("bnf,of->bno", sl, params["conv_w"][k]) + params["conv_b"][k], 0.0))
    feat = jnp.concatenate(parts, axis=-1)                        # (B, N, 32)
    h = jnp.maximum(feat @ params["fc1_w"].T + params["fc1_b"], 0.0)
    h = h @ params["fc2_w"].T + params["fc2_b"]                   # (B, N, 5)
    A = _mean_adjacency(edge_index, N)
    o1 = (jnp.einsum("nm,bmf->bnf", A, h) @ params["g1_lw"].T + params["g1_lb"]
          + h @ params["g1_rw"].T)
    o2 = (jnp.einsum("nm,bmf->bnf", A, o1) @ params["g2_lw"].T + params["g2_lb"]
          + o1 @ params["g2_rw"].T)
    return jnp.transpose(o2, (0, 2, 1))                           # (B, 1, N)


if __name__ == "__main__":
    key = jax.random.PRNGKey(0)
    k_x, k_p = jax.random.split(key)

    B, S, N, F = 2, 1, 8, 108
    x = jax.random.normal(k_x, (B, S, N, F), jnp.float32)

    # Deterministic bidirectional ring graph on N nodes: edge_index shape (2, 2N).
    src = jnp.arange(N, dtype=jnp.int32)
    dst = (src + 1) % N
    edge_index = jnp.concatenate([jnp.stack([src, dst]), jnp.stack([dst, src])], axis=1)

    params = init_params(k_p)

    out = cnn_fc_graphsage_forward(x, edge_index, params)
    out = jax.block_until_ready(out)

    assert out.shape == (B, 1, N), out.shape
    ref = reference_forward(x, edge_index, params)
    assert jnp.allclose(out, ref, atol=1e-4, rtol=1e-4), "Pallas kernel mismatch vs JAX reference"

    print("KERNEL_OK")
</pallas_src>

<mosaic_0001>
module attributes {stable_mosaic.version = 11 : i64} {
  func.func @_forward_kernel(%arg0: i32, %arg1: memref<1x8x128xf32, #tpu.memory_space<vmem>>, %arg2: memref<128x256xf32, #tpu.memory_space<vmem>>, %arg3: memref<1x20xf32, #tpu.memory_space<vmem>>, %arg4: memref<20x20xf32, #tpu.memory_space<vmem>>, %arg5: memref<1x20xf32, #tpu.memory_space<vmem>>, %arg6: memref<20x5xf32, #tpu.memory_space<vmem>>, %arg7: memref<1x5xf32, #tpu.memory_space<vmem>>, %arg8: memref<8x8xf32, #tpu.memory_space<vmem>>, %arg9: memref<5x20xf32, #tpu.memory_space<vmem>>, %arg10: memref<5x20xf32, #tpu.memory_space<vmem>>, %arg11: memref<1x20xf32, #tpu.memory_space<vmem>>, %arg12: memref<20x1xf32, #tpu.memory_space<vmem>>, %arg13: memref<20x1xf32, #tpu.memory_space<vmem>>, %arg14: memref<1x1xf32, #tpu.memory_space<vmem>>, %arg15: memref<1x1x8xf32, #tpu.memory_space<vmem>>) attributes {dimension_semantics = [#tpu.dimension_semantics<parallel>], iteration_bounds = array<i64: 2>, scalar_prefetch = 0 : i64, scratch_operands = 0 : i64, tpu.core_type = #tpu.core_type<tc>, window_params = [{transform_indices = @transform_0, window_bounds = array<i64: 1, 8, 128>}, {pipeline_mode = #tpu.pipeline_mode<synchronous>, transform_indices = @transform_1, window_bounds = array<i64: 128, 256>}, {pipeline_mode = #tpu.pipeline_mode<synchronous>, transform_indices = @transform_2, window_bounds = array<i64: 1, 20>}, {pipeline_mode = #tpu.pipeline_mode<synchronous>, transform_indices = @transform_3, window_bounds = array<i64: 20, 20>}, {pipeline_mode = #tpu.pipeline_mode<synchronous>, transform_indices = @transform_4, window_bounds = array<i64: 1, 20>}, {pipeline_mode = #tpu.pipeline_mode<synchronous>, transform_indices = @transform_5, window_bounds = array<i64: 20, 5>}, {pipeline_mode = #tpu.pipeline_mode<synchronous>, transform_indices = @transform_6, window_bounds = array<i64: 1, 5>}, {pipeline_mode = #tpu.pipeline_mode<synchronous>, transform_indices = @transform_7, window_bounds = array<i64: 8, 8>}, {pipeline_mode = #tpu.pipeline_mode<synchronous>, transform_indices = @transform_8, window_bounds = array<i64: 5, 20>}, {pipeline_mode = #tpu.pipeline_mode<synchronous>, transform_indices = @transform_9, window_bounds = array<i64: 5, 20>}, {pipeline_mode = #tpu.pipeline_mode<synchronous>, transform_indices = @transform_10, window_bounds = array<i64: 1, 20>}, {pipeline_mode = #tpu.pipeline_mode<synchronous>, transform_indices = @transform_11, window_bounds = array<i64: 20, 1>}, {pipeline_mode = #tpu.pipeline_mode<synchronous>, transform_indices = @transform_12, window_bounds = array<i64: 20, 1>}, {pipeline_mode = #tpu.pipeline_mode<synchronous>, transform_indices = @transform_13, window_bounds = array<i64: 1, 1>}, {transform_indices = @transform_14, window_bounds = array<i64: 1, 1, 8>}]} {
    %c0 = arith.constant 0 : index
    %c0_0 = arith.constant 0 : index
    %c0_1 = arith.constant 0 : index
    %0 = vector.load %arg1[%c0, %c0_0, %c0_1] : memref<1x8x128xf32, #tpu.memory_space<vmem>>, vector<1x8x128xf32>
    %1 = vector.shape_cast %0 : vector<1x8x128xf32> to vector<8x128xf32>
    %c0_2 = arith.constant 0 : index
    %c0_3 = arith.constant 0 : index
    %2 = vector.load %arg2[%c0_2, %c0_3] : memref<128x256xf32, #tpu.memory_space<vmem>>, vector<128x256xf32>
    %cst = arith.constant dense<0.000000e+00> : vector<8x256xf32>
    %3 = tpu.matmul %1, %2, %cst {dimension_numbers = #tpu.dot_dimension_numbers<[1], [0], [0], [1], [0, 0, 1, 1], [], []>} : vector<8x128xf32>, vector<128x256xf32>, vector<8x256xf32> -> vector<8x256xf32>
    %4 = vector.extract_strided_slice %3 {offsets = [0, 0], sizes = [8, 20], strides = [1, 1]} : vector<8x256xf32> to vector<8x20xf32>
    %c0_4 = arith.constant 0 : index
    %c0_5 = arith.constant 0 : index
    %5 = vector.load %arg3[%c0_4, %c0_5] : memref<1x20xf32, #tpu.memory_space<vmem>>, vector<1x20xf32>
    %6 = vector.broadcast %5 : vector<1x20xf32> to vector<8x20xf32>
    %7 = arith.addf %4, %6 : vector<8x20xf32>
    %cst_6 = arith.constant 0.000000e+00 : f32
    %8 = vector.broadcast %cst_6 : f32 to vector<8x20xf32>
    %9 = arith.maximumf %7, %8 : vector<8x20xf32>
    %10 = vector.extract_strided_slice %3 {offsets = [0, 128], sizes = [8, 20], strides = [1, 1]} : vector<8x256xf32> to vector<8x20xf32>
    %c0_7 = arith.constant 0 : index
    %c0_8 = arith.constant 0 : index
    %11 = vector.load %arg4[%c0_7, %c0_8] : memref<20x20xf32, #tpu.memory_space<vmem>>, vector<20x20xf32>
    %cst_9 = arith.constant dense<0.000000e+00> : vector<8x20xf32>
    %12 = tpu.matmul %9, %11, %cst_9 {dimension_numbers = #tpu.dot_dimension_numbers<[1], [0], [0], [1], [0, 0, 1, 1], [], []>} : vector<8x20xf32>, vector<20x20xf32>, vector<8x20xf32> -> vector<8x20xf32>
    %13 = arith.addf %10, %12 : vector<8x20xf32>
    %c0_10 = arith.constant 0 : index
    %c0_11 = arith.constant 0 : index
    %14 = vector.load %arg5[%c0_10, %c0_11] : memref<1x20xf32, #tpu.memory_space<vmem>>, vector<1x20xf32>
    %15 = vector.broadcast %14 : vector<1x20xf32> to vector<8x20xf32>
    %16 = arith.addf %13, %15 : vector<8x20xf32>
    %cst_12 = arith.constant 0.000000e+00 : f32
    %17 = vector.broadcast %cst_12 : f32 to vector<8x20xf32>
    %18 = arith.maximumf %16, %17 : vector<8x20xf32>
    %c0_13 = arith.constant 0 : index
    %c0_14 = arith.constant 0 : index
    %19 = vector.load %arg6[%c0_13, %c0_14] : memref<20x5xf32, #tpu.memory_space<vmem>>, vector<20x5xf32>
    %cst_15 = arith.constant dense<0.000000e+00> : vector<8x5xf32>
    %20 = tpu.matmul %18, %19, %cst_15 {dimension_numbers = #tpu.dot_dimension_numbers<[1], [0], [0], [1], [0, 0, 1, 1], [], []>} : vector<8x20xf32>, vector<20x5xf32>, vector<8x5xf32> -> vector<8x5xf32>
    %c0_16 = arith.constant 0 : index
    %c0_17 = arith.constant 0 : index
    %21 = vector.load %arg7[%c0_16, %c0_17] : memref<1x5xf32, #tpu.memory_space<vmem>>, vector<1x5xf32>
    %22 = vector.broadcast %21 : vector<1x5xf32> to vector<8x5xf32>
    %23 = arith.addf %20, %22 : vector<8x5xf32>
    %c0_18 = arith.constant 0 : index
    %c0_19 = arith.constant 0 : index
    %24 = vector.load %arg8[%c0_18, %c0_19] : memref<8x8xf32, #tpu.memory_space<vmem>>, vector<8x8xf32>
    %cst_20 = arith.constant dense<0.000000e+00> : vector<8x5xf32>
    %25 = tpu.matmul %24, %23, %cst_20 {dimension_numbers = #tpu.dot_dimension_numbers<[1], [0], [0], [1], [0, 0, 1, 1], [], []>} : vector<8x8xf32>, vector<8x5xf32>, vector<8x5xf32> -> vector<8x5xf32>
    %c0_21 = arith.constant 0 : index
    %c0_22 = arith.constant 0 : index
    %26 = vector.load %arg9[%c0_21, %c0_22] : memref<5x20xf32, #tpu.memory_space<vmem>>, vector<5x20xf32>
    %cst_23 = arith.constant dense<0.000000e+00> : vector<8x20xf32>
    %27 = tpu.matmul %25, %26, %cst_23 {dimension_numbers = #tpu.dot_dimension_numbers<[1], [0], [0], [1], [0, 0, 1, 1], [], []>} : vector<8x5xf32>, vector<5x20xf32>, vector<8x20xf32> -> vector<8x20xf32>
    %c0_24 = arith.constant 0 : index
    %c0_25 = arith.constant 0 : index
    %28 = vector.load %arg11[%c0_24, %c0_25] : memref<1x20xf32, #tpu.memory_space<vmem>>, vector<1x20xf32>
    %29 = vector.broadcast %28 : vector<1x20xf32> to vector<8x20xf32>
    %30 = arith.addf %27, %29 : vector<8x20xf32>
    %c0_26 = arith.constant 0 : index
    %c0_27 = arith.constant 0 : index
    %31 = vector.load %arg10[%c0_26, %c0_27] : memref<5x20xf32, #tpu.memory_space<vmem>>, vector<5x20xf32>
    %cst_28 = arith.constant dense<0.000000e+00> : vector<8x20xf32>
    %32 = tpu.matmul %23, %31, %cst_28 {dimension_numbers = #tpu.dot_dimension_numbers<[1], [0], [0], [1], [0, 0, 1, 1], [], []>} : vector<8x5xf32>, vector<5x20xf32>, vector<8x20xf32> -> vector<8x20xf32>
    %33 = arith.addf %30, %32 : vector<8x20xf32>
    %cst_29 = arith.constant dense<0.000000e+00> : vector<8x20xf32>
    %34 = tpu.matmul %24, %33, %cst_29 {dimension_numbers = #tpu.dot_dimension_numbers<[1], [0], [0], [1], [0, 0, 1, 1], [], []>} : vector<8x8xf32>, vector<8x20xf32>, vector<8x20xf32> -> vector<8x20xf32>
    %c0_30 = arith.constant 0 : index
    %c0_31 = arith.constant 0 : index
    %35 = vector.load %arg12[%c0_30, %c0_31] : memref<20x1xf32, #tpu.memory_space<vmem>>, vector<20x1xf32>
    %cst_32 = arith.constant dense<0.000000e+00> : vector<8x1xf32>
    %36 = tpu.matmul %34, %35, %cst_32 {dimension_numbers = #tpu.dot_dimension_numbers<[1], [0], [0], [1], [0, 0, 1, 1], [], []>} : vector<8x20xf32>, vector<20x1xf32>, vector<8x1xf32> -> vector<8x1xf32>
    %c0_33 = arith.constant 0 : index
    %c0_34 = arith.constant 0 : index
    %37 = vector.load %arg14[%c0_33, %c0_34] : memref<1x1xf32, #tpu.memory_space<vmem>>, vector<1x1xf32>
    %38 = vector.broadcast %37 : vector<1x1xf32> to vector<8x1xf32>
    %39 = arith.addf %36, %38 : vector<8x1xf32>
    %c0_35 = arith.constant 0 : index
    %c0_36 = arith.constant 0 : index
    %40 = vector.load %arg13[%c0_35, %c0_36] : memref<20x1xf32, #tpu.memory_space<vmem>>, vector<20x1xf32>
    %cst_37 = arith.constant dense<0.000000e+00> : vector<8x1xf32>
    %41 = tpu.matmul %33, %40, %cst_37 {dimension_numbers = #tpu.dot_dimension_numbers<[1], [0], [0], [1], [0, 0, 1, 1], [], []>} : vector<8x20xf32>, vector<20x1xf32>, vector<8x1xf32> -> vector<8x1xf32>
    %42 = arith.addf %39, %41 : vector<8x1xf32>
    %43 = tpu.transpose %42, [1, 0] : vector<8x1xf32> -> vector<1x8xf32>
    %44 = vector.shape_cast %43 : vector<1x8xf32> to vector<1x1x8xf32>
    %c0_38 = arith.constant 0 : index
    %c0_39 = arith.constant 0 : index
    %c0_40 = arith.constant 0 : index
    %45 = vector.load %arg15[%c0_38, %c0_39, %c0_40] : memref<1x1x8xf32, #tpu.memory_space<vmem>>, vector<1x1x8xf32>
    tpu.vector_store %arg15[%c0_38, %c0_39, %c0_40], %44 {strides = array<i32>} : memref<1x1x8xf32, #tpu.memory_space<vmem>>, vector<1x1x8xf32>,
    return
  }
  func.func @transform_0(%arg0: i32) -> (i32, i32, i32) {
    %c0_i32 = arith.constant 0 : i32
    %c0_i32_0 = arith.constant 0 : i32
    %c0_i32_1 = arith.constant 0 : i32
    return %arg0, %c0_i32, %c0_i32_0 : i32, i32, i32
  }
  func.func @transform_1(%arg0: i32) -> (i32, i32) {
    %c0_i32 = arith.constant 0 : i32
    %c0_i32_0 = arith.constant 0 : i32
    %c0_i32_1 = arith.constant 0 : i32
    return %c0_i32, %c0_i32_0 : i32, i32
  }
  func.func @transform_2(%arg0: i32) -> (i32, i32) {
    %c0_i32 = arith.constant 0 : i32
    %c0_i32_0 = arith.constant 0 : i32
    %c0_i32_1 = arith.constant 0 : i32
    return %c0_i32, %c0_i32_0 : i32, i32
  }
  func.func @transform_3(%arg0: i32) -> (i32, i32) {
    %c0_i32 = arith.constant 0 : i32
    %c0_i32_0 = arith.constant 0 : i32
    %c0_i32_1 = arith.constant 0 : i32
    return %c0_i32, %c0_i32_0 : i32, i32
  }
  func.func @transform_4(%arg0: i32) -> (i32, i32) {
    %c0_i32 = arith.constant 0 : i32
    %c0_i32_0 = arith.constant 0 : i32
    %c0_i32_1 = arith.constant 0 : i32
    return %c0_i32, %c0_i32_0 : i32, i32
  }
  func.func @transform_5(%arg0: i32) -> (i32, i32) {
    %c0_i32 = arith.constant 0 : i32
    %c0_i32_0 = arith.constant 0 : i32
    %c0_i32_1 = arith.constant 0 : i32
    return %c0_i32, %c0_i32_0 : i32, i32
  }
  func.func @transform_6(%arg0: i32) -> (i32, i32) {
    %c0_i32 = arith.constant 0 : i32
    %c0_i32_0 = arith.constant 0 : i32
    %c0_i32_1 = arith.constant 0 : i32
    return %c0_i32, %c0_i32_0 : i32, i32
  }
  func.func @transform_7(%arg0: i32) -> (i32, i32) {
    %c0_i32 = arith.constant 0 : i32
    %c0_i32_0 = arith.constant 0 : i32
    %c0_i32_1 = arith.constant 0 : i32
    return %c0_i32, %c0_i32_0 : i32, i32
  }
  func.func @transform_8(%arg0: i32) -> (i32, i32) {
    %c0_i32 = arith.constant 0 : i32
    %c0_i32_0 = arith.constant 0 : i32
    %c0_i32_1 = arith.constant 0 : i32
    return %c0_i32, %c0_i32_0 : i32, i32
  }
  func.func @transform_9(%arg0: i32) -> (i32, i32) {
    %c0_i32 = arith.constant 0 : i32
    %c0_i32_0 = arith.constant 0 : i32
    %c0_i32_1 = arith.constant 0 : i32
    return %c0_i32, %c0_i32_0 : i32, i32
  }
  func.func @transform_10(%arg0: i32) -> (i32, i32) {
    %c0_i32 = arith.constant 0 : i32
    %c0_i32_0 = arith.constant 0 : i32
    %c0_i32_1 = arith.constant 0 : i32
    return %c0_i32, %c0_i32_0 : i32, i32
  }
  func.func @transform_11(%arg0: i32) -> (i32, i32) {
    %c0_i32 = arith.constant 0 : i32
    %c0_i32_0 = arith.constant 0 : i32
    %c0_i32_1 = arith.constant 0 : i32
    return %c0_i32, %c0_i32_0 : i32, i32
  }
  func.func @transform_12(%arg0: i32) -> (i32, i32) {
    %c0_i32 = arith.constant 0 : i32
    %c0_i32_0 = arith.constant 0 : i32
    %c0_i32_1 = arith.constant 0 : i32
    return %c0_i32, %c0_i32_0 : i32, i32
  }
  func.func @transform_13(%arg0: i32) -> (i32, i32) {
    %c0_i32 = arith.constant 0 : i32
    %c0_i32_0 = arith.constant 0 : i32
    %c0_i32_1 = arith.constant 0 : i32
    return %c0_i32, %c0_i32_0 : i32, i32
  }
  func.func @transform_14(%arg0: i32) -> (i32, i32, i32) {
    %c0_i32 = arith.constant 0 : i32
    %c0_i32_0 = arith.constant 0 : i32
    %c0_i32_1 = arith.constant 0 : i32
    return %arg0, %c0_i32, %c0_i32_0 : i32, i32, i32
  }
}

</mosaic_0001>

<llo_original>
// kernel: tpu_custom_call.1
$region0: #{tpu_custom_call.1}
  #allocation0 [shape = 'u32[]', space=smem, size = 0x4, offset = 0x4, fixed_abs, tag = 'smem constant byte address 0x4 - core index']
  #allocation1 [shape = 'u32[144,128]{1,0:T(1,128)}', space=vmem, size = 0x12000, scoped, tag = 'internal scratch']
  #allocation2 [shape = 'f32[1,1]{1,0:T(1,128)S(1)}', space=vmem, size = 0x200, scoped, tag = 'scoped memory for tpu_custom_call.1']
  %s0 = inlined_call_operand.vmem [shape: f32[2,8,128], index: 0, kind: input, shape index: {}]
  %s1 = inlined_call_operand.hbm [shape: f32[128,256], index: 1, kind: input, shape index: {}]
  %s2 = inlined_call_operand.vmem [shape: f32[1,20], index: 2, kind: input, shape index: {}]
  %s3 = inlined_call_operand.vmem [shape: f32[20,20], index: 3, kind: input, shape index: {}]
  %s4 = inlined_call_operand.vmem [shape: f32[1,20], index: 4, kind: input, shape index: {}]
  %s5 = inlined_call_operand.vmem [shape: f32[20,5], index: 5, kind: input, shape index: {}]
  %s6 = inlined_call_operand.vmem [shape: f32[1,5], index: 6, kind: input, shape index: {}]
  %s7 = inlined_call_operand.vmem [shape: f32[8,8], index: 7, kind: input, shape index: {}]
  %s8 = inlined_call_operand.vmem [shape: f32[5,20], index: 8, kind: input, shape index: {}]
  %s9 = inlined_call_operand.vmem [shape: f32[5,20], index: 9, kind: input, shape index: {}]
  %s10 = inlined_call_operand.vmem [shape: f32[1,20], index: 10, kind: input, shape index: {}]
  %s11 = inlined_call_operand.vmem [shape: f32[20,1], index: 11, kind: input, shape index: {}]
  %s12 = inlined_call_operand.vmem [shape: f32[20,1], index: 12, kind: input, shape index: {}]
  %s13 = inlined_call_operand.<no memory space> [shape: f32[1,1], index: 13, kind: input, shape index: {}]
  %s14 = inlined_call_operand.hbm [shape: f32[2,1,8], index: 14, kind: output, shape index: {}]
  %s15 = sld [smem:[#allocation0]]
  $region93: #{tpu_custom_call.1} parent=0
    _
  %s17 = ssub.s32 1, %s15
  %s18 = scalar_select 0, %s17, %s15
  %v19 = vstv %s13
  %20 = vst [vmem:[#allocation2] sm:$0x1] %v19
  $region1: #{tpu_custom_call.1} parent=0
    #allocation3 [shape = 'u8[131072]{0}', space=vmem, size = 0x20000, scoped, tag = 'input window, operand 1, single buffered']
    #allocation4 [shape = 's32[2]{0}', space=sflag, size = 0x8, scoped, tag = 'scoped memory for tpu_custom_call.1']
    #allocation5 [shape = 's32[2]{0}', space=sflag, size = 0x8, scoped, tag = 'scoped memory for tpu_custom_call.1']
    #allocation6 [shape = 'u8[1024]{0}', space=vmem, size = 0x400, scoped, tag = 'output window, operand 0']
    %21 = vsyncpa [#allocation4], 0
    %22 = vsyncpa [#allocation5], 0
    %s23 = scalar_lea.sflag [#allocation5], 1
    %24 = vsyncpa %s23, 0
    loop: start=0, step=1, limit=4
    $region2: #{tpu_custom_call.1} parent=1 // loop_pre_header
      _
    $region3: #{tpu_custom_call.1} parent=1 // loop_header
      %s26 = sphi 0, %s30
      %p27 = scmp.ge.s32.totalorder %s26, 4
      %s36 = sphi 0, %s38
      %s39 = sphi 0, %s36
      %s40 = sphi 0, %s39
      %s56 = sphi 0, %s40
      %s60 = sphi 0, %s60
      %s62 = sphi 0, %s60
      %s63 = sphi 0, %s62
      %s77 = sphi 0, %s63
      %s81 = sphi 0, %s81
      %s83 = sphi 0, %s81
      %s84 = sphi 0, %s83
      %s98 = sphi 0, %s84
      %s102 = sphi 0, %s102
      %s104 = sphi 0, %s102
      %s105 = sphi 0, %s104
      %s119 = sphi 0, %s105
      %s123 = sphi 0, %s123
      %s125 = sphi 0, %s123
      %s126 = sphi 0, %s125
      %s140 = sphi 0, %s126
      %s144 = sphi 0, %s144
      %s146 = sphi 0, %s144
      %s147 = sphi 0, %s146
      %s161 = sphi 0, %s147
      %s165 = sphi 0, %s165
      %s167 = sphi 0, %s165
      %s168 = sphi 0, %s167
      %s182 = sphi 0, %s168
      %s186 = sphi 0, %s186
      %s188 = sphi 0, %s186
      %s189 = sphi 0, %s188
      %s203 = sphi 0, %s189
      %s207 = sphi 0, %s207
      %s209 = sphi 0, %s207
      %s210 = sphi 0, %s209
      %s224 = sphi 0, %s210
      %s228 = sphi 0, %s228
      %s230 = sphi 0, %s228
      %s231 = sphi 0, %s230
      %s245 = sphi 0, %s231
      %s249 = sphi 0, %s249
      %s251 = sphi 0, %s249
      %s252 = sphi 0, %s251
      %s266 = sphi 0, %s252
      %s270 = sphi 0, %s270
      %s272 = sphi 0, %s270
      %s273 = sphi 0, %s272
      %s287 = sphi 0, %s273
      %s291 = sphi 0, %s291
      %s293 = sphi 0, %s291
      %s294 = sphi 0, %s293
      %s308 = sphi 0, %s294
      %s312 = sphi 0, %s312
      %s314 = sphi 0, %s312
      %s315 = sphi 0, %s314
      %s329 = sphi 0, %s315
      %s335 = sphi 0, %s337
      %s338 = sphi 0, %s335
      %s339 = sphi 0, %s338
      %s355 = sphi 0, %s339
    $region4: #{tpu_custom_call.1} parent=1 // loop_header_branch
      %29 = sbr.rel (%p27) target = $region8
    $region5: #{tpu_custom_call.1} parent=1 // loop_body
      %s31 = ssub.s32 %s26, 1
      %s32 = ssub.s32 %s26, 2
      %s33 = sadd.s32 %s26, 1
      %s34 = ssub.s32 %s26, %s33
      %p35 = scmp.eq.s32.totalorder %s34, 0
      %s37 = sadd.s32 %s36, 1
      %s38 = scalar_select %p35, %s36, %s37
      %p41 = pneg %p35
      %p42 = scmp.eq.s32.totalorder %s26, 1
      %p43 = por %p41, %p42
      %p44 = scmp.ne.s32.totalorder %s36, %s39
      %p45 = scmp.eq.s32.totalorder %s26, 0
      %p46 = por %p44, %p45
      %p47 = scmp.ne.s32.totalorder %s36, %s39
      %p48 = scmp.eq.s32.totalorder %s31, 1
      %p49 = por %p47, %p48
      %p50 = scmp.ne.s32.totalorder %s39, %s40
      %p51 = scmp.eq.s32.totalorder %s31, 0
      %p52 = por %p50, %p51
      %p53 = scmp.ne.s32.totalorder %s39, %s40
      %p54 = scmp.eq.s32.totalorder %s32, 1
      %p55 = por %p53, %p54
      %p57 = scmp.ne.s32.totalorder %s40, %s56
      %p58 = scmp.eq.s32.totalorder %s32, 0
      %p59 = por %p57, %p58
      %s61 = sadd.s32 %s60, 1
      %p64 = scmp.eq.s32.totalorder %s26, 1
      %p65 = scmp.ne.s32.totalorder %s60, %s62
      %p66 = scmp.eq.s32.totalorder %s26, 0
      %p67 = por %p65, %p66
      %p68 = scmp.ne.s32.totalorder %s60, %s62
      %p69 = scmp.eq.s32.totalorder %s31, 1
      %p70 = por %p68, %p69
      %p71 = scmp.ne.s32.totalorder %s62, %s63
      %p72 = scmp.eq.s32.totalorder %s31, 0
      %p73 = por %p71, %p72
      %p74 = scmp.ne.s32.totalorder %s62, %s63
      %p75 = scmp.eq.s32.totalorder %s32, 1
      %p76 = por %p74, %p75
      %p78 = scmp.ne.s32.totalorder %s63, %s77
      %p79 = scmp.eq.s32.totalorder %s32, 0
      %p80 = por %p78, %p79
      %s82 = sadd.s32 %s81, 1
      %p85 = scmp.eq.s32.totalorder %s26, 1
      %p86 = scmp.ne.s32.totalorder %s81, %s83
      %p87 = scmp.eq.s32.totalorder %s26, 0
      %p88 = por %p86, %p87
      %p89 = scmp.ne.s32.totalorder %s81, %s83
      %p90 = scmp.eq.s32.totalorder %s31, 1
      %p91 = por %p89, %p90
      %p92 = scmp.ne.s32.totalorder %s83, %s84
      %p93 = scmp.eq.s32.totalorder %s31, 0
      %p94 = por %p92, %p93
      %p95 = scmp.ne.s32.totalorder %s83, %s84
      %p96 = scmp.eq.s32.totalorder %s32, 1
      %p97 = por %p95, %p96
      %p99 = scmp.ne.s32.totalorder %s84, %s98
      %p100 = scmp.eq.s32.totalorder %s32, 0
      %p101 = por %p99, %p100
      %s103 = sadd.s32 %s102, 1
      %p106 = scmp.eq.s32.totalorder %s26, 1
      %p107 = scmp.ne.s32.totalorder %s102, %s104
      %p108 = scmp.eq.s32.totalorder %s26, 0
      %p109 = por %p107, %p108
      %p110 = scmp.ne.s32.totalorder %s102, %s104
      %p111 = scmp.eq.s32.totalorder %s31, 1
      %p112 = por %p110, %p111
      %p113 = scmp.ne.s32.totalorder %s104, %s105
      %p114 = scmp.eq.s32.totalorder %s31, 0
      %p115 = por %p113, %p114
      %p116 = scmp.ne.s32.totalorder %s104, %s105
      %p117 = scmp.eq.s32.totalorder %s32, 1
      %p118 = por %p116, %p117
      %p120 = scmp.ne.s32.totalorder %s105, %s119
      %p121 = scmp.eq.s32.totalorder %s32, 0
      %p122 = por %p120, %p121
      %s124 = sadd.s32 %s123, 1
      %p127 = scmp.eq.s32.totalorder %s26, 1
      %p128 = scmp.ne.s32.totalorder %s123, %s125
      %p129 = scmp.eq.s32.totalorder %s26, 0
      %p130 = por %p128, %p129
      %p131 = scmp.ne.s32.totalorder %s123, %s125
      %p132 = scmp.eq.s32.totalorder %s31, 1
      %p133 = por %p131, %p132
      %p134 = scmp.ne.s32.totalorder %s125, %s126
      %p135 = scmp.eq.s32.totalorder %s31, 0
      %p136 = por %p134, %p135
      %p137 = scmp.ne.s32.totalorder %s125, %s126
      %p138 = scmp.eq.s32.totalorder %s32, 1
      %p139 = por %p137, %p138
      %p141 = scmp.ne.s32.totalorder %s126, %s140
      %p142 = scmp.eq.s32.totalorder %s32, 0
      %p143 = por %p141, %p142
      %s145 = sadd.s32 %s144, 1
      %p148 = scmp.eq.s32.totalorder %s26, 1
      %p149 = scmp.ne.s32.totalorder %s144, %s146
      %p150 = scmp.eq.s32.totalorder %s26, 0
      %p151 = por %p149, %p150
      %p152 = scmp.ne.s32.totalorder %s144, %s146
      %p153 = scmp.eq.s32.totalorder %s31, 1
      %p154 = por %p152, %p153
      %p155 = scmp.ne.s32.totalorder %s146, %s147
      %p156 = scmp.eq.s32.totalorder %s31, 0
      %p157 = por %p155, %p156
      %p158 = scmp.ne.s32.totalorder %s146, %s147
      %p159 = scmp.eq.s32.totalorder %s32, 1
      %p160 = por %p158, %p159
      %p162 = scmp.ne.s32.totalorder %s147, %s161
      %p163 = scmp.eq.s32.totalorder %s32, 0
      %p164 = por %p162, %p163
      %s166 = sadd.s32 %s165, 1
      %p169 = scmp.eq.s32.totalorder %s26, 1
      %p170 = scmp.ne.s32.totalorder %s165, %s167
      %p171 = scmp.eq.s32.totalorder %s26, 0
      %p172 = por %p170, %p171
      %p173 = scmp.ne.s32.totalorder %s165, %s167
      %p174 = scmp.eq.s32.totalorder %s31, 1
      %p175 = por %p173, %p174
      %p176 = scmp.ne.s32.totalorder %s167, %s168
      %p177 = scmp.eq.s32.totalorder %s31, 0
      %p178 = por %p176, %p177
      %p179 = scmp.ne.s32.totalorder %s167, %s168
      %p180 = scmp.eq.s32.totalorder %s32, 1
      %p181 = por %p179, %p180
      %p183 = scmp.ne.s32.totalorder %s168, %s182
      %p184 = scmp.eq.s32.totalorder %s32, 0
      %p185 = por %p183, %p184
      %s187 = sadd.s32 %s186, 1
      %p190 = scmp.eq.s32.totalorder %s26, 1
      %p191 = scmp.ne.s32.totalorder %s186, %s188
      %p192 = scmp.eq.s32.totalorder %s26, 0
      %p193 = por %p191, %p192
      %p194 = scmp.ne.s32.totalorder %s186, %s188
      %p195 = scmp.eq.s32.totalorder %s31, 1
      %p196 = por %p194, %p195
      %p197 = scmp.ne.s32.totalorder %s188, %s189
      %p198 = scmp.eq.s32.totalorder %s31, 0
      %p199 = por %p197, %p198
      %p200 = scmp.ne.s32.totalorder %s188, %s189
      %p201 = scmp.eq.s32.totalorder %s32, 1
      %p202 = por %p200, %p201
      %p204 = scmp.ne.s32.totalorder %s189, %s203
      %p205 = scmp.eq.s32.totalorder %s32, 0
      %p206 = por %p204, %p205
      %s208 = sadd.s32 %s207, 1
      %p211 = scmp.eq.s32.totalorder %s26, 1
      %p212 = scmp.ne.s32.totalorder %s207, %s209
      %p213 = scmp.eq.s32.totalorder %s26, 0
      %p214 = por %p212, %p213
      %p215 = scmp.ne.s32.totalorder %s207, %s209
      %p216 = scmp.eq.s32.totalorder %s31, 1
      %p217 = por %p215, %p216
      %p218 = scmp.ne.s32.totalorder %s209, %s210
      %p219 = scmp.eq.s32.totalorder %s31, 0
      %p220 = por %p218, %p219
      %p221 = scmp.ne.s32.totalorder %s209, %s210
      %p222 = scmp.eq.s32.totalorder %s32, 1
      %p223 = por %p221, %p222
      %p225 = scmp.ne.s32.totalorder %s210, %s224
      %p226 = scmp.eq.s32.totalorder %s32, 0
      %p227 = por %p225, %p226
      %s229 = sadd.s32 %s228, 1
      %p232 = scmp.eq.s32.totalorder %s26, 1
      %p233 = scmp.ne.s32.totalorder %s228, %s230
      %p234 = scmp.eq.s32.totalorder %s26, 0
      %p235 = por %p233, %p234
      %p236 = scmp.ne.s32.totalorder %s228, %s230
      %p237 = scmp.eq.s32.totalorder %s31, 1
      %p238 = por %p236, %p237
      %p239 = scmp.ne.s32.totalorder %s230, %s231
      %p240 = scmp.eq.s32.totalorder %s31, 0
      %p241 = por %p239, %p240
      %p242 = scmp.ne.s32.totalorder %s230, %s231
      %p243 = scmp.eq.s32.totalorder %s32, 1
      %p244 = por %p242, %p243
      %p246 = scmp.ne.s32.totalorder %s231, %s245
      %p247 = scmp.eq.s32.totalorder %s32, 0
      %p248 = por %p246, %p247
      %s250 = sadd.s32 %s249, 1
      %p253 = scmp.eq.s32.totalorder %s26, 1
      %p254 = scmp.ne.s32.totalorder %s249, %s251
      %p255 = scmp.eq.s32.totalorder %s26, 0
      %p256 = por %p254, %p255
      %p257 = scmp.ne.s32.totalorder %s249, %s251
      %p258 = scmp.eq.s32.totalorder %s31, 1
      %p259 = por %p257, %p258
      %p260 = scmp.ne.s32.totalorder %s251, %s252
      %p261 = scmp.eq.s32.totalorder %s31, 0
      %p262 = por %p260, %p261
      %p263 = scmp.ne.s32.totalorder %s251, %s252
      %p264 = scmp.eq.s32.totalorder %s32, 1
      %p265 = por %p263, %p264
      %p267 = scmp.ne.s32.totalorder %s252, %s266
      %p268 = scmp.eq.s32.totalorder %s32, 0
      %p269 = por %p267, %p268
      %s271 = sadd.s32 %s270, 1
      %p274 = scmp.eq.s32.totalorder %s26, 1
      %p275 = scmp.ne.s32.totalorder %s270, %s272
      %p276 = scmp.eq.s32.totalorder %s26, 0
      %p277 = por %p275, %p276
      %p278 = scmp.ne.s32.totalorder %s270, %s272
      %p279 = scmp.eq.s32.totalorder %s31, 1
      %p280 = por %p278, %p279
      %p281 = scmp.ne.s32.totalorder %s272, %s273
      %p282 = scmp.eq.s32.totalorder %s31, 0
      %p283 = por %p281, %p282
      %p284 = scmp.ne.s32.totalorder %s272, %s273
      %p285 = scmp.eq.s32.totalorder %s32, 1
      %p286 = por %p284, %p285
      %p288 = scmp.ne.s32.totalorder %s273, %s287
      %p289 = scmp.eq.s32.totalorder %s32, 0
      %p290 = por %p288, %p289
      %s292 = sadd.s32 %s291, 1
      %p295 = scmp.eq.s32.totalorder %s26, 1
      %p296 = scmp.ne.s32.totalorder %s291, %s293
      %p297 = scmp.eq.s32.totalorder %s26, 0
      %p298 = por %p296, %p297
      %p299 = scmp.ne.s32.totalorder %s291, %s293
      %p300 = scmp.eq.s32.totalorder %s31, 1
      %p301 = por %p299, %p300
      %p302 = scmp.ne.s32.totalorder %s293, %s294
      %p303 = scmp.eq.s32.totalorder %s31, 0
      %p304 = por %p302, %p303
      %p305 = scmp.ne.s32.totalorder %s293, %s294
      %p306 = scmp.eq.s32.totalorder %s32, 1
      %p307 = por %p305, %p306
      %p309 = scmp.ne.s32.totalorder %s294, %s308
      %p310 = scmp.eq.s32.totalorder %s32, 0
      %p311 = por %p309, %p310
      %s313 = sadd.s32 %s312, 1
      %p316 = scmp.eq.s32.totalorder %s26, 1
      %p317 = scmp.ne.s32.totalorder %s312, %s314
      %p318 = scmp.eq.s32.totalorder %s26, 0
      %p319 = por %p317, %p318
      %p320 = scmp.ne.s32.totalorder %s312, %s314
      %p321 = scmp.eq.s32.totalorder %s31, 1
      %p322 = por %p320, %p321
      %p323 = scmp.ne.s32.totalorder %s314, %s315
      %p324 = scmp.eq.s32.totalorder %s31, 0
      %p325 = por %p323, %p324
      %p326 = scmp.ne.s32.totalorder %s314, %s315
      %p327 = scmp.eq.s32.totalorder %s32, 1
      %p328 = por %p326, %p327
      %p330 = scmp.ne.s32.totalorder %s315, %s329
      %p331 = scmp.eq.s32.totalorder %s32, 0
      %p332 = por %p330, %p331
      %s333 = ssub.s32 %s26, %s33
      %p334 = scmp.eq.s32.totalorder %s333, 0
      %s336 = sadd.s32 %s335, 1
      %s337 = scalar_select %p334, %s335, %s336
      %p340 = pneg %p334
      %p341 = scmp.eq.s32.totalorder %s26, 1
      %p342 = por %p340, %p341
      %p343 = scmp.ne.s32.totalorder %s335, %s338
      %p344 = scmp.eq.s32.totalorder %s26, 0
      %p345 = por %p343, %p344
      %p346 = scmp.ne.s32.totalorder %s335, %s338
      %p347 = scmp.eq.s32.totalorder %s31, 1
      %p348 = por %p346, %p347
      %p349 = scmp.ne.s32.totalorder %s338, %s339
      %p350 = scmp.eq.s32.totalorder %s31, 0
      %p351 = por %p349, %p350
      %p352 = scmp.ne.s32.totalorder %s338, %s339
      %p353 = scmp.eq.s32.totalorder %s32, 1
      %p354 = por %p352, %p353
      %p356 = scmp.ne.s32.totalorder %s339, %s355
      %p357 = scmp.eq.s32.totalorder %s32, 0
      %p358 = por %p356, %p357
      %p359 = scmp.le.s32.totalorder 1, %s26
      %p360 = scmp.lt.s32.totalorder %s26, 3
      %p361 = pnand %p359, %p360
      %p362 = pneg %p361
      // Predicated region
      $region9: #{tpu_custom_call.1} parent=5 // pred_check
        _
      $region10: #{tpu_custom_call.1} parent=5 // pred_check_branch
        %364 = sbr.rel (%p361) target = $region12
      $region11: #{tpu_custom_call.1} parent=5 // pred_region
        %s365 = ssub.s32 %s26, 1
        // Predicated region
        $region13: #{tpu_custom_call.1} parent=11 // pred_check
          %p366 = pneg %p73
        $region14: #{tpu_custom_call.1} parent=11 // pred_check_branch
          %368 = sbr.rel (%p366) target = $region16
        $region15: #{tpu_custom_call.1} parent=11 // pred_region
          %s370 = ssub.s32 4096, 4096
          %371 = vsyncadd [#allocation4], %s370
          %s372 = sshll.u32 [#allocation3], 4
          %s373 = int_to_ptr.vmem [resolvable:$true] %s372
          %378 = dma.hbm_to_vmem [thread:$0]  %s1, 4096, %s373, [#allocation4], 256, 256, 16
        $region16: #{tpu_custom_call.1} parent=11 // pred_fallthru
          _
        // Predicated region
        $region17: #{tpu_custom_call.1} parent=11 // pred_check
          %p379 = pneg %p94
        $region18: #{tpu_custom_call.1} parent=11 // pred_check_branch
          %381 = sbr.rel (%p379) target = $region20
        $region19: #{tpu_custom_call.1} parent=11 // pred_region
          _
        $region20: #{tpu_custom_call.1} parent=11 // pred_fallthru
          _
        // Predicated region
        $region21: #{tpu_custom_call.1} parent=11 // pred_check
          %p382 = pneg %p115
        $region22: #{tpu_custom_call.1} parent=11 // pred_check_branch
          %384 = sbr.rel (%p382) target = $region24
        $region23: #{tpu_custom_call.1} parent=11 // pred_region
          _
        $region24: #{tpu_custom_call.1} parent=11 // pred_fallthru
          _
        // Predicated region
        $region25: #{tpu_custom_call.1} parent=11 // pred_check
          %p385 = pneg %p136
        $region26: #{tpu_custom_call.1} parent=11 // pred_check_branch
          %387 = sbr.rel (%p385) target = $region28
        $region27: #{tpu_custom_call.1} parent=11 // pred_region
          _
        $region28: #{tpu_custom_call.1} parent=11 // pred_fallthru
          _
        // Predicated region
        $region29: #{tpu_custom_call.1} parent=11 // pred_check
          %p388 = pneg %p157
        $region30: #{tpu_custom_call.1} parent=11 // pred_check_branch
          %390 = sbr.rel (%p388) target = $region32
        $region31: #{tpu_custom_call.1} parent=11 // pred_region
          _
        $region32: #{tpu_custom_call.1} parent=11 // pred_fallthru
          _
        // Predicated region
        $region33: #{tpu_custom_call.1} parent=11 // pred_check
          %p391 = pneg %p178
        $region34: #{tpu_custom_call.1} parent=11 // pred_check_branch
          %393 = sbr.rel (%p391) target = $region36
        $region35: #{tpu_custom_call.1} parent=11 // pred_region
          _
        $region36: #{tpu_custom_call.1} parent=11 // pred_fallthru
          _
        // Predicated region
        $region37: #{tpu_custom_call.1} parent=11 // pred_check
          %p394 = pneg %p199
        $region38: #{tpu_custom_call.1} parent=11 // pred_check_branch
          %396 = sbr.rel (%p394) target = $region40
        $region39: #{tpu_custom_call.1} parent=11 // pred_region
          _
        $region40: #{tpu_custom_call.1} parent=11 // pred_fallthru
          _
        // Predicated region
        $region41: #{tpu_custom_call.1} parent=11 // pred_check
          %p397 = pneg %p220
        $region42: #{tpu_custom_call.1} parent=11 // pred_check_branch
          %399 = sbr.rel (%p397) target = $region44
        $region43: #{tpu_custom_call.1} parent=11 // pred_region
          _
        $region44: #{tpu_custom_call.1} parent=11 // pred_fallthru
          _
        // Predicated region
        $region45: #{tpu_custom_call.1} parent=11 // pred_check
          %p400 = pneg %p241
        $region46: #{tpu_custom_call.1} parent=11 // pred_check_branch
          %402 = sbr.rel (%p400) target = $region48
        $region47: #{tpu_custom_call.1} parent=11 // pred_region
          _
        $region48: #{tpu_custom_call.1} parent=11 // pred_fallthru
          _
        // Predicated region
        $region49: #{tpu_custom_call.1} parent=11 // pred_check
          %p403 = pneg %p262
        $region50: #{tpu_custom_call.1} parent=11 // pred_check_branch
          %405 = sbr.rel (%p403) target = $region52
        $region51: #{tpu_custom_call.1} parent=11 // pred_region
          _
        $region52: #{tpu_custom_call.1} parent=11 // pred_fallthru
          _
        // Predicated region
        $region53: #{tpu_custom_call.1} parent=11 // pred_check
          %p406 = pneg %p283
        $region54: #{tpu_custom_call.1} parent=11 // pred_check_branch
          %408 = sbr.rel (%p406) target = $region56
        $region55: #{tpu_custom_call.1} parent=11 // pred_region
          _
        $region56: #{tpu_custom_call.1} parent=11 // pred_fallthru
          _
        // Predicated region
        $region57: #{tpu_custom_call.1} parent=11 // pred_check
          %p409 = pneg %p304
        $region58: #{tpu_custom_call.1} parent=11 // pred_check_branch
          %411 = sbr.rel (%p409) target = $region60
        $region59: #{tpu_custom_call.1} parent=11 // pred_region
          _
        $region60: #{tpu_custom_call.1} parent=11 // pred_fallthru
          _
        // Predicated region
        $region61: #{tpu_custom_call.1} parent=11 // pred_check
          %p412 = pneg %p325
        $region62: #{tpu_custom_call.1} parent=11 // pred_check_branch
          %414 = sbr.rel (%p412) target = $region64
        $region63: #{tpu_custom_call.1} parent=11 // pred_region
          _
        $region64: #{tpu_custom_call.1} parent=11 // pred_fallthru
          _
      $region12: #{tpu_custom_call.1} parent=5 // pred_fallthru
        _
      %p415 = scmp.lt.s32.totalorder %s26, 2
      // Predicated region
      $region65: #{tpu_custom_call.1} parent=5 // pred_check
        %p416 = pneg %p415
      $region66: #{tpu_custom_call.1} parent=5 // pred_check_branch
        %418 = sbr.rel (%p416) target = $region68
      $region67: #{tpu_custom_call.1} parent=5 // pred_region
        // Predicated region
        $region69: #{tpu_custom_call.1} parent=67 // pred_check
          %p419 = pneg %p46
        $region70: #{tpu_custom_call.1} parent=67 // pred_check_branch
          %421 = sbr.rel (%p419) target = $region72
        $region71: #{tpu_custom_call.1} parent=67 // pred_region
          %p422 = scmp.lt.s32.totalorder %s26, 1
          %s423 = scalar_select %p422, %s26, 1
          %s424 = smul.addr %s423, 8
          %s425 = scalar_lea.vmem %s0, %s424
        $region72: #{tpu_custom_call.1} parent=67 // pred_fallthru
          _
      $region68: #{tpu_custom_call.1} parent=5 // pred_fallthru
        _
      %p426 = scmp.le.s32.totalorder 1, %s26
      %p427 = scmp.lt.s32.totalorder %s26, 3
      %p428 = pnand %p426, %p427
      %p429 = pneg %p428
      // Predicated region
      $region73: #{tpu_custom_call.1} parent=5 // pred_check
        _
      $region74: #{tpu_custom_call.1} parent=5 // pred_check_branch
        %431 = sbr.rel (%p428) target = $region76
      $region75: #{tpu_custom_call.1} parent=5 // pred_region
        %s432 = ssub.s32 %s26, 1
        // Predicated region
        $region77: #{tpu_custom_call.1} parent=75 // pred_check
          %p433 = pneg %p73
        $region78: #{tpu_custom_call.1} parent=75 // pred_check_branch
          %435 = sbr.rel (%p433) target = $region80
        $region79: #{tpu_custom_call.1} parent=75 // pred_region
          %436 = dma.done [#allocation4], 4096
        $region80: #{tpu_custom_call.1} parent=75 // pred_fallthru
          _
        %p437 = scmp.lt.s32.totalorder %s31, 1
        %s438 = scalar_select %p437, %s31, 1
        %s439 = smul.addr %s438, 8
        %s440 = scalar_lea.vmem %s0, %s439
        %p441 = pneg %p52
        %p442 = pneg %p49
        %p443 = pneg %p73
        %p444 = pneg %p70
        %p445 = pneg %p94
        %p446 = pneg %p91
        %p447 = pneg %p115
        %p448 = pneg %p112
        %p449 = pneg %p136
        %p450 = pneg %p133
        %p451 = pneg %p157
        %p452 = pneg %p154
        %p453 = pneg %p178
        %p454 = pneg %p175
        %p455 = pneg %p199
        %p456 = pneg %p196
        %p457 = pneg %p220
        %p458 = pneg %p217
        %p459 = pneg %p241
        %p460 = pneg %p238
        %p461 = pneg %p262
        %p462 = pneg %p259
        %p463 = pneg %p283
        %p464 = pneg %p280
        %p465 = pneg %p304
        %p466 = pneg %p301
        %p467 = pneg %p325
        %p468 = pneg %p322
        %p469 = pneg %p351
        %p470 = pneg %p348
        %s471 = sand.u32 %s338, 1
        %s472 = scalar_lea.sflag [#allocation5], %s471
        %s473 = sand.u32 %s338, 1
        %s474 = scalar_lea.vmem [#allocation6], %s473
        %p475 = scmp.lt.s32.totalorder %s31, 1
        %s476 = scalar_select %p475, %s31, 1
        %s477 = smul.addr %s476, 8
        %s478 = scalar_lea.vmem %s0, %s477
        %v479 = vld [vmem:[%s478] sm:$0xff]
        %v480 = vld [vmem:[#allocation3] sm:$0xff]
        %v481 = vld [vmem:[#allocation3 + $0x8] sm:$0xff]
        %v482 = vld [vmem:[#allocation3 + $0x10] sm:$0xff]
        %v483 = vld [vmem:[#allocation3 + $0x18] sm:$0xff]
        %v484 = vld [vmem:[#allocation3 + $0x20] sm:$0xff]
        %v485 = vld [vmem:[#allocation3 + $0x28] sm:$0xff]
        %v486 = vld [vmem:[#allocation3 + $0x30] sm:$0xff]
        %v487 = vld [vmem:[#allocation3 + $0x38] sm:$0xff]
        %v488 = vld [vmem:[#allocation3 + $0x40] sm:$0xff]
        %v489 = vld [vmem:[#allocation3 + $0x48] sm:$0xff]
        %v490 = vld [vmem:[#allocation3 + $0x50] sm:$0xff]
        %v491 = vld [vmem:[#allocation3 + $0x58] sm:$0xff]
        %v492 = vld [vmem:[#allocation3 + $0x60] sm:$0xff]
        %v493 = vld [vmem:[#allocation3 + $0x68] sm:$0xff]
        %v494 = vld [vmem:[#allocation3 + $0x70] sm:$0xff]
        %v495 = vld [vmem:[#allocation3 + $0x78] sm:$0xff]
        %v496 = vld [vmem:[#allocation3 + $0x80] sm:$0xff]
        %v497 = vld [vmem:[#allocation3 + $0x88] sm:$0xff]
        %v498 = vld [vmem:[#allocation3 + $0x90] sm:$0xff]
        %v499 = vld [vmem:[#allocation3 + $0x98] sm:$0xff]
        %v500 = vld [vmem:[#allocation3 + $0xa0] sm:$0xff]
        %v501 = vld [vmem:[#allocation3 + $0xa8] sm:$0xff]
        %v502 = vld [vmem:[#allocation3 + $0xb0] sm:$0xff]
        %v503 = vld [vmem:[#allocation3 + $0xb8] sm:$0xff]
        %v504 = vld [vmem:[#allocation3 + $0xc0] sm:$0xff]
        %v505 = vld [vmem:[#allocation3 + $0xc8] sm:$0xff]
        %v506 = vld [vmem:[#allocation3 + $0xd0] sm:$0xff]
        %v507 = vld [vmem:[#allocation3 + $0xd8] sm:$0xff]
        %v508 = vld [vmem:[#allocation3 + $0xe0] sm:$0xff]
        %v509 = vld [vmem:[#allocation3 + $0xe8] sm:$0xff]
        %v510 = vld [vmem:[#allocation3 + $0xf0] sm:$0xff]
        %v511 = vld [vmem:[#allocation3 + $0xf8] sm:$0xff]
        %512 = vmatprep.subr.mxu0 %v481
        %513 = vmatpush1.msra.mxu0 %v480
        %514 = vmatprep.subr.mxu0 %v483
        %515 = vmatpush1.msra.mxu0 %v482
        %516 = vmatprep.subr.mxu0 %v485
        %517 = vmatpush1.msra.mxu0 %v484
        %518 = vmatprep.subr.mxu0 %v487
        %519 = vmatpush1.msra.mxu0 %v486
        %520 = vmatprep.subr.mxu0 %v489
        %521 = vmatpush1.msra.mxu0 %v488
        %522 = vmatprep.subr.mxu0 %v491
        %523 = vmatpush1.msra.mxu0 %v490
        %524 = vmatprep.subr.mxu0 %v493
        %525 = vmatpush1.msra.mxu0 %v492
        %526 = vmatprep.subr.mxu0 %v495
        %527 = vmatpush1.msra.mxu0 %v494
        %528 = vmatprep.subr.mxu0 %v497
        %529 = vmatpush1.msra.mxu0 %v496
        %530 = vmatprep.subr.mxu0 %v499
        %531 = vmatpush1.msra.mxu0 %v498
        %532 = vmatprep.subr.mxu0 %v501
        %533 = vmatpush1.msra.mxu0 %v500
        %534 = vmatprep.subr.mxu0 %v503
        %535 = vmatpush1.msra.mxu0 %v502
        %536 = vmatprep.subr.mxu0 %v505
        %537 = vmatpush1.msra.mxu0 %v504
        %538 = vmatprep.subr.mxu0 %v507
        %539 = vmatpush1.msra.mxu0 %v506
        %540 = vmatprep.subr.mxu0 %v509
        %541 = vmatpush1.msra.mxu0 %v508
        %542 = vmatprep.subr.mxu0 %v511
        %543 = vmatpush1.msra.mxu0 %v510
        %544 = vmatprep.subr.mxu0 0.0
        %545 = vmatpush1.msra.mxu0 0.0
        %546 = vmatprep.subr.mxu0 0.0
        %547 = vmatpush1.msra.mxu0 0.0
        %548 = vmatprep.subr.mxu0 0.0
        %549 = vmatpush1.msra.mxu0 0.0
        %550 = vmatprep.subr.mxu0 0.0
        %551 = vmatpush1.msra.mxu0 0.0
        %552 = vmatprep.subr.mxu0 0.0
        %553 = vmatpush1.msra.mxu0 0.0
        %554 = vmatprep.subr.mxu0 0.0
        %555 = vmatpush1.msra.mxu0 0.0
        %556 = vmatprep.subr.mxu0 0.0
        %557 = vmatpush1.msra.mxu0 0.0
        %558 = vmatprep.subr.mxu0 0.0
        %559 = vmatpush1.msra.mxu0 0.0
        %560 = vmatprep.subr.mxu0 0.0
        %561 = vmatpush1.msra.mxu0 0.0
        %562 = vmatprep.subr.mxu0 0.0
        %563 = vmatpush1.msra.mxu0 0.0
        %564 = vmatprep.subr.mxu0 0.0
        %565 = vmatpush1.msra.mxu0 0.0
        %566 = vmatprep.subr.mxu0 0.0
        %567 = vmatpush1.msra.mxu0 0.0
        %568 = vmatprep.subr.mxu0 0.0
        %569 = vmatpush1.msra.mxu0 0.0
        %570 = vmatprep.subr.mxu0 0.0
        %571 = vmatpush1.msra.mxu0 0.0
        %572 = vmatprep.subr.mxu0 0.0
        %573 = vmatpush1.msra.mxu0 0.0
        %574 = vmatprep.subr.mxu0 0.0
        %575 = vmatpush1.msra.mxu0 0.0
        %576 = vmatprep.mubr.f32.mxu0 0.0
        %577 = vmatmul.mubr.f32.gmra.mrb[0].mxu0 %v479
        %v578 = vpop.f32.mrb[0].mxu0
        %v579 = vadd.f32 0.0, %v578
        %v580 = vpop.f32.mrb[0].mxu0
        %v581 = vadd.f32 0.0, %v580
        %582 = vdwg.mxu0
        %v583 = vld [vmem:[%s2] sm:$0x1]
        %v585 = vlaneseq
        %v586 = vshrl.u32 %v585, 7
        %v587 = vsub.s32 0, %v586
        %v588 = vrot.slane %v583, %v587
        %v590 = vadd.f32 %v579, %v588
        %v591 = vmax.f32 %v590, 0.0
        %v592 = vld [vmem:[%s3] sm:$0xff]
        %v593 = vld [vmem:[%s3 + $0x8] sm:$0xff]
        %v594 = vld [vmem:[%s3 + $0x10] sm:$0xf]
        %vm595 = vcmask 162816
        %v597 = vsel %vm595, %v591, 0
        %vm599 = vcmask 1043456
        %v601 = vsel %vm599, %v594, 0
        %603 = vmatprep.subr.mxu0 0.0
        %604 = vmatpush1.msra.mxu0 %v592
        %605 = vmatprep.subr.mxu0 0.0
        %606 = vmatpush1.msra.mxu0 %v593
        %607 = vmatprep.subr.mxu0 0.0
        %608 = vmatpush1.msra.mxu0 %v601
        %609 = vmatprep.subr.mxu0 0.0
        %610 = vmatpush1.msra.mxu0 0.0
        %611 = vmatprep.subr.mxu0 0.0
        %612 = vmatpush1.msra.mxu0 0.0
        %613 = vmatprep.subr.mxu0 0.0
        %614 = vmatpush1.msra.mxu0 0.0
        %615 = vmatprep.subr.mxu0 0.0
        %616 = vmatpush1.msra.mxu0 0.0
        %617 = vmatprep.subr.mxu0 0.0
        %618 = vmatpush1.msra.mxu0 0.0
        %619 = vmatprep.subr.mxu0 0.0
        %620 = vmatpush1.msra.mxu0 0.0
        %621 = vmatprep.subr.mxu0 0.0
        %622 = vmatpush1.msra.mxu0 0.0
        %623 = vmatprep.subr.mxu0 0.0
        %624 = vmatpush1.msra.mxu0 0.0
        %625 = vmatprep.subr.mxu0 0.0
        %626 = vmatpush1.msra.mxu0 0.0
        %627 = vmatprep.subr.mxu0 0.0
        %628 = vmatpush1.msra.mxu0 0.0
        %629 = vmatprep.subr.mxu0 0.0
        %630 = vmatpush1.msra.mxu0 0.0
        %631 = vmatprep.subr.mxu0 0.0
        %632 = vmatpush1.msra.mxu0 0.0
        %633 = vmatprep.subr.mxu0 0.0
        %634 = vmatpush1.msra.mxu0 0.0
        %635 = vmatprep.subr.mxu0 0.0
        %636 = vmatpush1.msra.mxu0 0.0
        %637 = vmatprep.subr.mxu0 0.0
        %638 = vmatpush1.msra.mxu0 0.0
        %639 = vmatprep.subr.mxu0 0.0
        %640 = vmatpush1.msra.mxu0 0.0
        %641 = vmatprep.subr.mxu0 0.0
        %642 = vmatpush1.msra.mxu0 0.0
        %643 = vmatprep.subr.mxu0 0.0
        %644 = vmatpush1.msra.mxu0 0.0
        %645 = vmatprep.subr.mxu0 0.0
        %646 = vmatpush1.msra.mxu0 0.0
        %647 = vmatprep.subr.mxu0 0.0
        %648 = vmatpush1.msra.mxu0 0.0
        %649 = vmatprep.subr.mxu0 0.0
        %650 = vmatpush1.msra.mxu0 0.0
        %651 = vmatprep.subr.mxu0 0.0
        %652 = vmatpush1.msra.mxu0 0.0
        %653 = vmatprep.subr.mxu0 0.0
        %654 = vmatpush1.msra.mxu0 0.0
        %655 = vmatprep.subr.mxu0 0.0
        %656 = vmatpush1.msra.mxu0 0.0
        %657 = vmatprep.subr.mxu0 0.0
        %658 = vmatpush1.msra.mxu0 0.0
        %659 = vmatprep.subr.mxu0 0.0
        %660 = vmatpush1.msra.mxu0 0.0
        %661 = vmatprep.subr.mxu0 0.0
        %662 = vmatpush1.msra.mxu0 0.0
        %663 = vmatprep.subr.mxu0 0.0
        %664 = vmatpush1.msra.mxu0 0.0
        %665 = vmatprep.subr.mxu0 0.0
        %666 = vmatpush1.msra.mxu0 0.0
        %667 = vmatprep.mubr.f32.mxu0 0.0
        %668 = vmatmul.mubr.f32.gmra.mrb[0].mxu0 %v597
        %v669 = vpop.f32.mrb[0].mxu0
        %v670 = vadd.f32 0.0, %v669
        %v671 = vpop.f32.mrb[0].mxu0
        %672 = vdwg.mxu0
        %v673 = vadd.f32 %v581, %v670
        %v674 = vld [vmem:[%s4] sm:$0x1]
        %v676 = vlaneseq
        %v677 = vshrl.u32 %v676, 7
        %v678 = vsub.s32 0, %v677
        %v679 = vrot.slane %v674, %v678
        %v681 = vadd.f32 %v673, %v679
        %v682 = vmax.f32 %v681, 0.0
        %v683 = vld [vmem:[%s5] sm:$0xff]
        %v684 = vld [vmem:[%s5 + $0x8] sm:$0xff]
        %v685 = vld [vmem:[%s5 + $0x10] sm:$0xf]
        %v686 = vld [vmem:[%s6] sm:$0x1]
        %v688 = vlaneseq
        %v689 = vshrl.u32 %v688, 7
        %v690 = vsub.s32 0, %v689
        %v691 = vrot.slane %v686, %v690
        %v694 = vsel %vm595, %v682, 0
        %v697 = vsel %vm599, %v685, 0
        %699 = vmatprep.subr.mxu0 0.0
        %700 = vmatpush1.msra.mxu0 %v683
        %701 = vmatprep.subr.mxu0 0.0
        %702 = vmatpush1.msra.mxu0 %v684
        %703 = vmatprep.subr.mxu0 0.0
        %704 = vmatpush1.msra.mxu0 %v697
        %705 = vmatprep.subr.mxu0 0.0
        %706 = vmatpush1.msra.mxu0 0.0
        %707 = vmatprep.subr.mxu0 0.0
        %708 = vmatpush1.msra.mxu0 0.0
        %709 = vmatprep.subr.mxu0 0.0
        %710 = vmatpush1.msra.mxu0 0.0
        %711 = vmatprep.subr.mxu0 0.0
        %712 = vmatpush1.msra.mxu0 0.0
        %713 = vmatprep.subr.mxu0 0.0
        %714 = vmatpush1.msra.mxu0 0.0
        %715 = vmatprep.subr.mxu0 0.0
        %716 = vmatpush1.msra.mxu0 0.0
        %717 = vmatprep.subr.mxu0 0.0
        %718 = vmatpush1.msra.mxu0 0.0
        %719 = vmatprep.subr.mxu0 0.0
        %720 = vmatpush1.msra.mxu0 0.0
        %721 = vmatprep.subr.mxu0 0.0
        %722 = vmatpush1.msra.mxu0 0.0
        %723 = vmatprep.subr.mxu0 0.0
        %724 = vmatpush1.msra.mxu0 0.0
        %725 = vmatprep.subr.mxu0 0.0
        %726 = vmatpush1.msra.mxu0 0.0
        %727 = vmatprep.subr.mxu0 0.0
        %728 = vmatpush1.msra.mxu0 0.0
        %729 = vmatprep.subr.mxu0 0.0
        %730 = vmatpush1.msra.mxu0 0.0
        %731 = vmatprep.subr.mxu0 0.0
        %732 = vmatpush1.msra.mxu0 0.0
        %733 = vmatprep.subr.mxu0 0.0
        %734 = vmatpush1.msra.mxu0 0.0
        %735 = vmatprep.subr.mxu0 0.0
        %736 = vmatpush1.msra.mxu0 0.0
        %737 = vmatprep.subr.mxu0 0.0
        %738 = vmatpush1.msra.mxu0 0.0
        %739 = vmatprep.subr.mxu0 0.0
        %740 = vmatpush1.msra.mxu0 0.0
        %741 = vmatprep.subr.mxu0 0.0
        %742 = vmatpush1.msra.mxu0 0.0
        %743 = vmatprep.subr.mxu0 0.0
        %744 = vmatpush1.msra.mxu0 0.0
        %745 = vmatprep.subr.mxu0 0.0
        %746 = vmatpush1.msra.mxu0 0.0
        %747 = vmatprep.subr.mxu0 0.0
        %748 = vmatpush1.msra.mxu0 0.0
        %749 = vmatprep.subr.mxu0 0.0
        %750 = vmatpush1.msra.mxu0 0.0
        %751 = vmatprep.subr.mxu0 0.0
        %752 = vmatpush1.msra.mxu0 0.0
        %753 = vmatprep.subr.mxu0 0.0
        %754 = vmatpush1.msra.mxu0 0.0
        %755 = vmatprep.subr.mxu0 0.0
        %756 = vmatpush1.msra.mxu0 0.0
        %757 = vmatprep.subr.mxu0 0.0
        %758 = vmatpush1.msra.mxu0 0.0
        %759 = vmatprep.subr.mxu0 0.0
        %760 = vmatpush1.msra.mxu0 0.0
        %761 = vmatprep.subr.mxu0 0.0
        %762 = vmatpush1.msra.mxu0 0.0
        %763 = vmatprep.mubr.f32.mxu0 0.0
        %764 = vmatmul.mubr.f32.gmra.mrb[0].mxu0 %v694
        %v765 = vpop.f32.mrb[0].mxu0
        %v766 = vadd.f32 %v691, %v765
        %v767 = vpop.f32.mrb[0].mxu0
        %768 = vdwg.mxu0
        %v769 = vld [vmem:[%s7] sm:$0xff]
        %vm770 = vcmask 64512
        %v772 = vsel %vm770, %v769, 0
        %774 = vmatprep.subr.mxu0 0.0
        %775 = vmatpush1.msra.mxu0 %v766
        %776 = vmatprep.subr.mxu0 0.0
        %777 = vmatpush1.msra.mxu0 0.0
        %778 = vmatprep.subr.mxu0 0.0
        %779 = vmatpush1.msra.mxu0 0.0
        %780 = vmatprep.subr.mxu0 0.0
        %781 = vmatpush1.msra.mxu0 0.0
        %782 = vmatprep.subr.mxu0 0.0
        %783 = vmatpush1.msra.mxu0 0.0
        %784 = vmatprep.subr.mxu0 0.0
        %785 = vmatpush1.msra.mxu0 0.0
        %786 = vmatprep.subr.mxu0 0.0
        %787 = vmatpush1.msra.mxu0 0.0
        %788 = vmatprep.subr.mxu0 0.0
        %789 = vmatpush1.msra.mxu0 0.0
        %790 = vmatprep.subr.mxu0 0.0
        %791 = vmatpush1.msra.mxu0 0.0
        %792 = vmatprep.subr.mxu0 0.0
        %793 = vmatpush1.msra.mxu0 0.0
        %794 = vmatprep.subr.mxu0 0.0
        %795 = vmatpush1.msra.mxu0 0.0
        %796 = vmatprep.subr.mxu0 0.0
        %797 = vmatpush1.msra.mxu0 0.0
        %798 = vmatprep.subr.mxu0 0.0
        %799 = vmatpush1.msra.mxu0 0.0
        %800 = vmatprep.subr.mxu0 0.0
        %801 = vmatpush1.msra.mxu0 0.0
        %802 = vmatprep.subr.mxu0 0.0
        %803 = vmatpush1.msra.mxu0 0.0
        %804 = vmatprep.subr.mxu0 0.0
        %805 = vmatpush1.msra.mxu0 0.0
        %806 = vmatprep.subr.mxu0 0.0
        %807 = vmatpush1.msra.mxu0 0.0
        %808 = vmatprep.subr.mxu0 0.0
        %809 = vmatpush1.msra.mxu0 0.0
        %810 = vmatprep.subr.mxu0 0.0
        %811 = vmatpush1.msra.mxu0 0.0
        %812 = vmatprep.subr.mxu0 0.0
        %813 = vmatpush1.msra.mxu0 0.0
        %814 = vmatprep.subr.mxu0 0.0
        %815 = vmatpush1.msra.mxu0 0.0
        %816 = vmatprep.subr.mxu0 0.0
        %817 = vmatpush1.msra.mxu0 0.0
        %818 = vmatprep.subr.mxu0 0.0
        %819 = vmatpush1.msra.mxu0 0.0
        %820 = vmatprep.subr.mxu0 0.0
        %821 = vmatpush1.msra.mxu0 0.0
        %822 = vmatprep.subr.mxu0 0.0
        %823 = vmatpush1.msra.mxu0 0.0
        %824 = vmatprep.subr.mxu0 0.0
        %825 = vmatpush1.msra.mxu0 0.0
        %826 = vmatprep.subr.mxu0 0.0
        %827 = vmatpush1.msra.mxu0 0.0
        %828 = vmatprep.subr.mxu0 0.0
        %829 = vmatpush1.msra.mxu0 0.0
        %830 = vmatprep.subr.mxu0 0.0
        %831 = vmatpush1.msra.mxu0 0.0
        %832 = vmatprep.subr.mxu0 0.0
        %833 = vmatpush1.msra.mxu0 0.0
        %834 = vmatprep.subr.mxu0 0.0
        %835 = vmatpush1.msra.mxu0 0.0
        %836 = vmatprep.subr.mxu0 0.0
        %837 = vmatpush1.msra.mxu0 0.0
        %838 = vmatprep.mubr.f32.mxu0 0.0
        %839 = vmatmul.mubr.f32.gmra.mrb[0].mxu0 %v772
        %v840 = vpop.f32.mrb[0].mxu0
        %v841 = vadd.f32 0.0, %v840
        %v842 = vpop.f32.mrb[0].mxu0
        %843 = vdwg.mxu0
        %v844 = vld [vmem:[%s8] sm:$0x1f]
        %v845 = vld [vmem:[%s10] sm:$0x1]
        %v847 = vlaneseq
        %v848 = vshrl.u32 %v847, 7
        %v849 = vsub.s32 0, %v848
        %v850 = vrot.slane %v845, %v849
        %vm852 = vcmask 39936
        %v854 = vsel %vm852, %v841, 0
        %vm856 = vcmask 1044480
        %v858 = vsel %vm856, %v844, 0
        %860 = vmatprep.subr.mxu0 0.0
        %861 = vmatpush1.msra.mxu0 %v858
        %862 = vmatprep.subr.mxu0 0.0
        %863 = vmatpush1.msra.mxu0 0.0
        %864 = vmatprep.subr.mxu0 0.0
        %865 = vmatpush1.msra.mxu0 0.0
        %866 = vmatprep.subr.mxu0 0.0
        %867 = vmatpush1.msra.mxu0 0.0
        %868 = vmatprep.subr.mxu0 0.0
        %869 = vmatpush1.msra.mxu0 0.0
        %870 = vmatprep.subr.mxu0 0.0
        %871 = vmatpush1.msra.mxu0 0.0
        %872 = vmatprep.subr.mxu0 0.0
        %873 = vmatpush1.msra.mxu0 0.0
        %874 = vmatprep.subr.mxu0 0.0
        %875 = vmatpush1.msra.mxu0 0.0
        %876 = vmatprep.subr.mxu0 0.0
        %877 = vmatpush1.msra.mxu0 0.0
        %878 = vmatprep.subr.mxu0 0.0
        %879 = vmatpush1.msra.mxu0 0.0
        %880 = vmatprep.subr.mxu0 0.0
        %881 = vmatpush1.msra.mxu0 0.0
        %882 = vmatprep.subr.mxu0 0.0
        %883 = vmatpush1.msra.mxu0 0.0
        %884 = vmatprep.subr.mxu0 0.0
        %885 = vmatpush1.msra.mxu0 0.0
        %886 = vmatprep.subr.mxu0 0.0
        %887 = vmatpush1.msra.mxu0 0.0
        %888 = vmatprep.subr.mxu0 0.0
        %889 = vmatpush1.msra.mxu0 0.0
        %890 = vmatprep.subr.mxu0 0.0
        %891 = vmatpush1.msra.mxu0 0.0
        %892 = vmatprep.subr.mxu0 0.0
        %893 = vmatpush1.msra.mxu0 0.0
        %894 = vmatprep.subr.mxu0 0.0
        %895 = vmatpush1.msra.mxu0 0.0
        %896 = vmatprep.subr.mxu0 0.0
        %897 = vmatpush1.msra.mxu0 0.0
        %898 = vmatprep.subr.mxu0 0.0
        %899 = vmatpush1.msra.mxu0 0.0
        %900 = vmatprep.subr.mxu0 0.0
        %901 = vmatpush1.msra.mxu0 0.0
        %902 = vmatprep.subr.mxu0 0.0
        %903 = vmatpush1.msra.mxu0 0.0
        %904 = vmatprep.subr.mxu0 0.0
        %905 = vmatpush1.msra.mxu0 0.0
        %906 = vmatprep.subr.mxu0 0.0
        %907 = vmatpush1.msra.mxu0 0.0
        %908 = vmatprep.subr.mxu0 0.0
        %909 = vmatpush1.msra.mxu0 0.0
        %910 = vmatprep.subr.mxu0 0.0
        %911 = vmatpush1.msra.mxu0 0.0
        %912 = vmatprep.subr.mxu0 0.0
        %913 = vmatpush1.msra.mxu0 0.0
        %914 = vmatprep.subr.mxu0 0.0
        %915 = vmatpush1.msra.mxu0 0.0
        %916 = vmatprep.subr.mxu0 0.0
        %917 = vmatpush1.msra.mxu0 0.0
        %918 = vmatprep.subr.mxu0 0.0
        %919 = vmatpush1.msra.mxu0 0.0
        %920 = vmatprep.subr.mxu0 0.0
        %921 = vmatpush1.msra.mxu0 0.0
        %922 = vmatprep.subr.mxu0 0.0
        %923 = vmatpush1.msra.mxu0 0.0
        %924 = vmatprep.mubr.f32.mxu0 0.0
        %925 = vmatmul.mubr.f32.gmra.mrb[0].mxu0 %v854
        %v926 = vpop.f32.mrb[0].mxu0
        %v927 = vadd.f32 %v850, %v926
        %v928 = vpop.f32.mrb[0].mxu0
        %929 = vdwg.mxu0
        %v930 = vld [vmem:[%s9] sm:$0x1f]
        %v932 = vsel %vm852, %v766, 0
        %v935 = vsel %vm856, %v930, 0
        %937 = vmatprep.subr.mxu0 0.0
        %938 = vmatpush1.msra.mxu0 %v935
        %939 = vmatprep.subr.mxu0 0.0
        %940 = vmatpush1.msra.mxu0 0.0
        %941 = vmatprep.subr.mxu0 0.0
        %942 = vmatpush1.msra.mxu0 0.0
        %943 = vmatprep.subr.mxu0 0.0
        %944 = vmatpush1.msra.mxu0 0.0
        %945 = vmatprep.subr.mxu0 0.0
        %946 = vmatpush1.msra.mxu0 0.0
        %947 = vmatprep.subr.mxu0 0.0
        %948 = vmatpush1.msra.mxu0 0.0
        %949 = vmatprep.subr.mxu0 0.0
        %950 = vmatpush1.msra.mxu0 0.0
        %951 = vmatprep.subr.mxu0 0.0
        %952 = vmatpush1.msra.mxu0 0.0
        %953 = vmatprep.subr.mxu0 0.0
        %954 = vmatpush1.msra.mxu0 0.0
        %955 = vmatprep.subr.mxu0 0.0
        %956 = vmatpush1.msra.mxu0 0.0
        %957 = vmatprep.subr.mxu0 0.0
        %958 = vmatpush1.msra.mxu0 0.0
        %959 = vmatprep.subr.mxu0 0.0
        %960 = vmatpush1.msra.mxu0 0.0
        %961 = vmatprep.subr.mxu0 0.0
        %962 = vmatpush1.msra.mxu0 0.0
        %963 = vmatprep.subr.mxu0 0.0
        %964 = vmatpush1.msra.mxu0 0.0
        %965 = vmatprep.subr.mxu0 0.0
        %966 = vmatpush1.msra.mxu0 0.0
        %967 = vmatprep.subr.mxu0 0.0
        %968 = vmatpush1.msra.mxu0 0.0
        %969 = vmatprep.subr.mxu0 0.0
        %970 = vmatpush1.msra.mxu0 0.0
        %971 = vmatprep.subr.mxu0 0.0
        %972 = vmatpush1.msra.mxu0 0.0
        %973 = vmatprep.subr.mxu0 0.0
        %974 = vmatpush1.msra.mxu0 0.0
        %975 = vmatprep.subr.mxu0 0.0
        %976 = vmatpush1.msra.mxu0 0.0
        %977 = vmatprep.subr.mxu0 0.0
        %978 = vmatpush1.msra.mxu0 0.0
        %979 = vmatprep.subr.mxu0 0.0
        %980 = vmatpush1.msra.mxu0 0.0
        %981 = vmatprep.subr.mxu0 0.0
        %982 = vmatpush1.msra.mxu0 0.0
        %983 = vmatprep.subr.mxu0 0.0
        %984 = vmatpush1.msra.mxu0 0.0
        %985 = vmatprep.subr.mxu0 0.0
        %986 = vmatpush1.msra.mxu0 0.0
        %987 = vmatprep.subr.mxu0 0.0
        %988 = vmatpush1.msra.mxu0 0.0
        %989 = vmatprep.subr.mxu0 0.0
        %990 = vmatpush1.msra.mxu0 0.0
        %991 = vmatprep.subr.mxu0 0.0
        %992 = vmatpush1.msra.mxu0 0.0
        %993 = vmatprep.subr.mxu0 0.0
        %994 = vmatpush1.msra.mxu0 0.0
        %995 = vmatprep.subr.mxu0 0.0
        %996 = vmatpush1.msra.mxu0 0.0
        %997 = vmatprep.subr.mxu0 0.0
        %998 = vmatpush1.msra.mxu0 0.0
        %999 = vmatprep.subr.mxu0 0.0
        %1000 = vmatpush1.msra.mxu0 0.0
        %1001 = vmatprep.mubr.f32.mxu0 0.0
        %1002 = vmatmul.mubr.f32.gmra.mrb[0].mxu0 %v932
        %v1003 = vpop.f32.mrb[0].mxu0
        %v1004 = vadd.f32 0.0, %v1003
        %v1005 = vpop.f32.mrb[0].mxu0
        %1006 = vdwg.mxu0
        %v1007 = vadd.f32 %v927, %v1004
        %1008 = vmatprep.subr.mxu0 0.0
        %1009 = vmatpush1.msra.mxu0 %v1007
        %1010 = vmatprep.subr.mxu0 0.0
        %1011 = vmatpush1.msra.mxu0 0.0
        %1012 = vmatprep.subr.mxu0 0.0
        %1013 = vmatpush1.msra.mxu0 0.0
        %1014 = vmatprep.subr.mxu0 0.0
        %1015 = vmatpush1.msra.mxu0 0.0
        %1016 = vmatprep.subr.mxu0 0.0
        %1017 = vmatpush1.msra.mxu0 0.0
        %1018 = vmatprep.subr.mxu0 0.0
        %1019 = vmatpush1.msra.mxu0 0.0
        %1020 = vmatprep.subr.mxu0 0.0
        %1021 = vmatpush1.msra.mxu0 0.0
        %1022 = vmatprep.subr.mxu0 0.0
        %1023 = vmatpush1.msra.mxu0 0.0
        %1024 = vmatprep.subr.mxu0 0.0
        %1025 = vmatpush1.msra.mxu0 0.0
        %1026 = vmatprep.subr.mxu0 0.0
        %1027 = vmatpush1.msra.mxu0 0.0
        %1028 = vmatprep.subr.mxu0 0.0
        %1029 = vmatpush1.msra.mxu0 0.0
        %1030 = vmatprep.subr.mxu0 0.0
        %1031 = vmatpush1.msra.mxu0 0.0
        %1032 = vmatprep.subr.mxu0 0.0
        %1033 = vmatpush1.msra.mxu0 0.0
        %1034 = vmatprep.subr.mxu0 0.0
        %1035 = vmatpush1.msra.mxu0 0.0
        %1036 = vmatprep.subr.mxu0 0.0
        %1037 = vmatpush1.msra.mxu0 0.0
        %1038 = vmatprep.subr.mxu0 0.0
        %1039 = vmatpush1.msra.mxu0 0.0
        %1040 = vmatprep.subr.mxu0 0.0
        %1041 = vmatpush1.msra.mxu0 0.0
        %1042 = vmatprep.subr.mxu0 0.0
        %1043 = vmatpush1.msra.mxu0 0.0
        %1044 = vmatprep.subr.mxu0 0.0
        %1045 = vmatpush1.msra.mxu0 0.0
        %1046 = vmatprep.subr.mxu0 0.0
        %1047 = vmatpush1.msra.mxu0 0.0
        %1048 = vmatprep.subr.mxu0 0.0
        %1049 = vmatpush1.msra.mxu0 0.0
        %1050 = vmatprep.subr.mxu0 0.0
        %1051 = vmatpush1.msra.mxu0 0.0
        %1052 = vmatprep.subr.mxu0 0.0
        %1053 = vmatpush1.msra.mxu0 0.0
        %1054 = vmatprep.subr.mxu0 0.0
        %1055 = vmatpush1.msra.mxu0 0.0
        %1056 = vmatprep.subr.mxu0 0.0
        %1057 = vmatpush1.msra.mxu0 0.0
        %1058 = vmatprep.subr.mxu0 0.0
        %1059 = vmatpush1.msra.mxu0 0.0
        %1060 = vmatprep.subr.mxu0 0.0
        %1061 = vmatpush1.msra.mxu0 0.0
        %1062 = vmatprep.subr.mxu0 0.0
        %1063 = vmatpush1.msra.mxu0 0.0
        %1064 = vmatprep.subr.mxu0 0.0
        %1065 = vmatpush1.msra.mxu0 0.0
        %1066 = vmatprep.subr.mxu0 0.0
        %1067 = vmatpush1.msra.mxu0 0.0
        %1068 = vmatprep.subr.mxu0 0.0
        %1069 = vmatpush1.msra.mxu0 0.0
        %1070 = vmatprep.subr.mxu0 0.0
        %1071 = vmatpush1.msra.mxu0 0.0
        %1072 = vmatprep.mubr.f32.mxu0 0.0
        %1073 = vmatmul.mubr.f32.gmra.mrb[0].mxu0 %v772
        %v1074 = vpop.f32.mrb[0].mxu0
        %v1075 = vadd.f32 0.0, %v1074
        %v1076 = vpop.f32.mrb[0].mxu0
        %1077 = vdwg.mxu0
        %v1078 = vld [vmem:[%s11] sm:$0xff]
        %v1079 = vld [vmem:[%s11 + $0x8] sm:$0xff]
        %v1080 = vld [vmem:[%s11 + $0x10] sm:$0xf]
        %v1081 = vld [vmem:[#allocation2] sm:$0x1]
        %v1083 = vlaneseq
        %v1084 = vshrl.u32 %v1083, 7
        %v1085 = vsub.s32 0, %v1084
        %v1086 = vrot.slane %v1081, %v1085
        %v1089 = vsel %vm595, %v1075, 0
        %v1092 = vsel %vm599, %v1080, 0
        %1094 = vmatprep.subr.mxu0 0.0
        %1095 = vmatpush1.msra.mxu0 %v1078
        %1096 = vmatprep.subr.mxu0 0.0
        %1097 = vmatpush1.msra.mxu0 %v1079
        %1098 = vmatprep.subr.mxu0 0.0
        %1099 = vmatpush1.msra.mxu0 %v1092
        %1100 = vmatprep.subr.mxu0 0.0
        %1101 = vmatpush1.msra.mxu0 0.0
        %1102 = vmatprep.subr.mxu0 0.0
        %1103 = vmatpush1.msra.mxu0 0.0
        %1104 = vmatprep.subr.mxu0 0.0
        %1105 = vmatpush1.msra.mxu0 0.0
        %1106 = vmatprep.subr.mxu0 0.0
        %1107 = vmatpush1.msra.mxu0 0.0
        %1108 = vmatprep.subr.mxu0 0.0
        %1109 = vmatpush1.msra.mxu0 0.0
        %1110 = vmatprep.subr.mxu0 0.0
        %1111 = vmatpush1.msra.mxu0 0.0
        %1112 = vmatprep.subr.mxu0 0.0
        %1113 = vmatpush1.msra.mxu0 0.0
        %1114 = vmatprep.subr.mxu0 0.0
        %1115 = vmatpush1.msra.mxu0 0.0
        %1116 = vmatprep.subr.mxu0 0.0
        %1117 = vmatpush1.msra.mxu0 0.0
        %1118 = vmatprep.subr.mxu0 0.0
        %1119 = vmatpush1.msra.mxu0 0.0
        %1120 = vmatprep.subr.mxu0 0.0
        %1121 = vmatpush1.msra.mxu0 0.0
        %1122 = vmatprep.subr.mxu0 0.0
        %1123 = vmatpush1.msra.mxu0 0.0
        %1124 = vmatprep.subr.mxu0 0.0
        %1125 = vmatpush1.msra.mxu0 0.0
        %1126 = vmatprep.subr.mxu0 0.0
        %1127 = vmatpush1.msra.mxu0 0.0
        %1128 = vmatprep.subr.mxu0 0.0
        %1129 = vmatpush1.msra.mxu0 0.0
        %1130 = vmatprep.subr.mxu0 0.0
        %1131 = vmatpush1.msra.mxu0 0.0
        %1132 = vmatprep.subr.mxu0 0.0
        %1133 = vmatpush1.msra.mxu0 0.0
        %1134 = vmatprep.subr.mxu0 0.0
        %1135 = vmatpush1.msra.mxu0 0.0
        %1136 = vmatprep.subr.mxu0 0.0
        %1137 = vmatpush1.msra.mxu0 0.0
        %1138 = vmatprep.subr.mxu0 0.0
        %1139 = vmatpush1.msra.mxu0 0.0
        %1140 = vmatprep.subr.mxu0 0.0
        %1141 = vmatpush1.msra.mxu0 0.0
        %1142 = vmatprep.subr.mxu0 0.0
        %1143 = vmatpush1.msra.mxu0 0.0
        %1144 = vmatprep.subr.mxu0 0.0
        %1145 = vmatpush1.msra.mxu0 0.0
        %1146 = vmatprep.subr.mxu0 0.0
        %1147 = vmatpush1.msra.mxu0 0.0
        %1148 = vmatprep.subr.mxu0 0.0
        %1149 = vmatpush1.msra.mxu0 0.0
        %1150 = vmatprep.subr.mxu0 0.0
        %1151 = vmatpush1.msra.mxu0 0.0
        %1152 = vmatprep.subr.mxu0 0.0
        %1153 = vmatpush1.msra.mxu0 0.0
        %1154 = vmatprep.subr.mxu0 0.0
        %1155 = vmatpush1.msra.mxu0 0.0
        %1156 = vmatprep.subr.mxu0 0.0
        %1157 = vmatpush1.msra.mxu0 0.0
        %1158 = vmatprep.mubr.f32.mxu0 0.0
        %1159 = vmatmul.mubr.f32.gmra.mrb[0].mxu0 %v1089
        %v1160 = vpop.f32.mrb[0].mxu0
        %v1161 = vadd.f32 %v1086, %v1160
        %v1162 = vpop.f32.mrb[0].mxu0
        %1163 = vdwg.mxu0
        %v1164 = vld [vmem:[%s12] sm:$0xff]
        %v1165 = vld [vmem:[%s12 + $0x8] sm:$0xff]
        %v1166 = vld [vmem:[%s12 + $0x10] sm:$0xf]
        %v1168 = vsel %vm595, %v1007, 0
        %v1171 = vsel %vm599, %v1166, 0
        %1173 = vmatprep.subr.mxu0 0.0
        %1174 = vmatpush1.msra.mxu0 %v1164
        %1175 = vmatprep.subr.mxu0 0.0
        %1176 = vmatpush1.msra.mxu0 %v1165
        %1177 = vmatprep.subr.mxu0 0.0
        %1178 = vmatpush1.msra.mxu0 %v1171
        %1179 = vmatprep.subr.mxu0 0.0
        %1180 = vmatpush1.msra.mxu0 0.0
        %1181 = vmatprep.subr.mxu0 0.0
        %1182 = vmatpush1.msra.mxu0 0.0
        %1183 = vmatprep.subr.mxu0 0.0
        %1184 = vmatpush1.msra.mxu0 0.0
        %1185 = vmatprep.subr.mxu0 0.0
        %1186 = vmatpush1.msra.mxu0 0.0
        %1187 = vmatprep.subr.mxu0 0.0
        %1188 = vmatpush1.msra.mxu0 0.0
        %1189 = vmatprep.subr.mxu0 0.0
        %1190 = vmatpush1.msra.mxu0 0.0
        %1191 = vmatprep.subr.mxu0 0.0
        %1192 = vmatpush1.msra.mxu0 0.0
        %1193 = vmatprep.subr.mxu0 0.0
        %1194 = vmatpush1.msra.mxu0 0.0
        %1195 = vmatprep.subr.mxu0 0.0
        %1196 = vmatpush1.msra.mxu0 0.0
        %1197 = vmatprep.subr.mxu0 0.0
        %1198 = vmatpush1.msra.mxu0 0.0
        %1199 = vmatprep.subr.mxu0 0.0
        %1200 = vmatpush1.msra.mxu0 0.0
        %1201 = vmatprep.subr.mxu0 0.0
        %1202 = vmatpush1.msra.mxu0 0.0
        %1203 = vmatprep.subr.mxu0 0.0
        %1204 = vmatpush1.msra.mxu0 0.0
        %1205 = vmatprep.subr.mxu0 0.0
        %1206 = vmatpush1.msra.mxu0 0.0
        %1207 = vmatprep.subr.mxu0 0.0
        %1208 = vmatpush1.msra.mxu0 0.0
        %1209 = vmatprep.subr.mxu0 0.0
        %1210 = vmatpush1.msra.mxu0 0.0
        %1211 = vmatprep.subr.mxu0 0.0
        %1212 = vmatpush1.msra.mxu0 0.0
        %1213 = vmatprep.subr.mxu0 0.0
        %1214 = vmatpush1.msra.mxu0 0.0
        %1215 = vmatprep.subr.mxu0 0.0
        %1216 = vmatpush1.msra.mxu0 0.0
        %1217 = vmatprep.subr.mxu0 0.0
        %1218 = vmatpush1.msra.mxu0 0.0
        %1219 = vmatprep.subr.mxu0 0.0
        %1220 = vmatpush1.msra.mxu0 0.0
        %1221 = vmatprep.subr.mxu0 0.0
        %1222 = vmatpush1.msra.mxu0 0.0
        %1223 = vmatprep.subr.mxu0 0.0
        %1224 = vmatpush1.msra.mxu0 0.0
        %1225 = vmatprep.subr.mxu0 0.0
        %1226 = vmatpush1.msra.mxu0 0.0
        %1227 = vmatprep.subr.mxu0 0.0
        %1228 = vmatpush1.msra.mxu0 0.0
        %1229 = vmatprep.subr.mxu0 0.0
        %1230 = vmatpush1.msra.mxu0 0.0
        %1231 = vmatprep.subr.mxu0 0.0
        %1232 = vmatpush1.msra.mxu0 0.0
        %1233 = vmatprep.subr.mxu0 0.0
        %1234 = vmatpush1.msra.mxu0 0.0
        %1235 = vmatprep.subr.mxu0 0.0
        %1236 = vmatpush1.msra.mxu0 0.0
        %1237 = vmatprep.mubr.f32.mxu0 0.0
        %1238 = vmatmul.mubr.f32.gmra.mrb[0].mxu0 %v1168
        %v1239 = vpop.f32.mrb[0].mxu0
        %v1240 = vadd.f32 0.0, %v1239
        %v1241 = vpop.f32.mrb[0].mxu0
        %1242 = vdwg.mxu0
        %v1243 = vadd.f32 %v1161, %v1240
        %1244 = vxpose.xlu0.b32.start [1/16] %v1243, 128
        %1245 = vxpose.xlu0.b32.cont [2/16] 0.0, 128
        %1246 = vxpose.xlu0.b32.cont [3/16] 0.0, 128
        %1247 = vxpose.xlu0.b32.cont [4/16] 0.0, 128
        %1248 = vxpose.xlu0.b32.cont [5/16] 0.0, 128
        %1249 = vxpose.xlu0.b32.cont [6/16] 0.0, 128
        %1250 = vxpose.xlu0.b32.cont [7/16] 0.0, 128
        %1251 = vxpose.xlu0.b32.cont [8/16] 0.0, 128
        %1252 = vxpose.xlu0.b32.cont [9/16] 0.0, 128
        %1253 = vxpose.xlu0.b32.cont [10/16] 0.0, 128
        %1254 = vxpose.xlu0.b32.cont [11/16] 0.0, 128
        %1255 = vxpose.xlu0.b32.cont [12/16] 0.0, 128
        %1256 = vxpose.xlu0.b32.cont [13/16] 0.0, 128
        %1257 = vxpose.xlu0.b32.cont [14/16] 0.0, 128
        %1258 = vxpose.xlu0.b32.cont [15/16] 0.0, 128
        %1259 = vxpose.xlu0.b32.end [16/16] 0.0, 128
        %v1260 = vpop.trf.xlu0
        %v1261 = vpop.trf.xlu0
        %v1262 = vpop.trf.xlu0
        %v1263 = vpop.trf.xlu0
        %v1264 = vpop.trf.xlu0
        %v1265 = vpop.trf.xlu0
        %v1266 = vpop.trf.xlu0
        %v1267 = vpop.trf.xlu0
        %v1268 = vpop.trf.xlu0
        %v1269 = vpop.trf.xlu0
        %v1270 = vpop.trf.xlu0
        %v1271 = vpop.trf.xlu0
        %v1272 = vpop.trf.xlu0
        %v1273 = vpop.trf.xlu0
        %v1274 = vpop.trf.xlu0
        %v1275 = vpop.trf.xlu0
        %vm1276 = vcmask 57344
        %1277 = vst.msk [vmem:[%s474] sm:$0x1] %vm1276, %v1260
        %s1278 = sand.u32 %s338, 1
        %s1279 = scalar_lea.sflag [#allocation5], %s1278
        %s1280 = sand.u32 %s338, 1
        %s1281 = scalar_lea.vmem [#allocation6], %s1280
        // Predicated region
        $region81: #{tpu_custom_call.1} parent=75 // pred_check
          %p1282 = pneg %p348
        $region82: #{tpu_custom_call.1} parent=75 // pred_check_branch
          %1284 = sbr.rel (%p1282) target = $region84
        $region83: #{tpu_custom_call.1} parent=75 // pred_region
          %s1286 = ssub.s32 16, 16
          %1287 = vsyncadd %s1279, %s1286
          %s1288 = smul.addr %s31, 16
          %s1289 = scalar_lea.hbm %s14, %s1288
          %s1291 = sshll.u32 %s1281, 4
          %s1292 = int_to_ptr.vmem [resolvable:$true] %s1291
          %1294 = dma.vmem_to_hbm [thread:$0]  %s1292, 16, %s1289, %s1279
        $region84: #{tpu_custom_call.1} parent=75 // pred_fallthru
          _
      $region76: #{tpu_custom_call.1} parent=5 // pred_fallthru
        _
      %p1295 = scmp.le.s32.totalorder 2, %s26
      // Predicated region
      $region85: #{tpu_custom_call.1} parent=5 // pred_check
        %p1296 = pneg %p1295
      $region86: #{tpu_custom_call.1} parent=5 // pred_check_branch
        %1298 = sbr.rel (%p1296) target = $region88
      $region87: #{tpu_custom_call.1} parent=5 // pred_region
        %s1299 = ssub.s32 %s26, 2
        // Predicated region
        $region89: #{tpu_custom_call.1} parent=87 // pred_check
          %p1300 = pneg %p354
        $region90: #{tpu_custom_call.1} parent=87 // pred_check_branch
          %1302 = sbr.rel (%p1300) target = $region92
        $region91: #{tpu_custom_call.1} parent=87 // pred_region
          %s1303 = sand.u32 %s339, 1
          %s1304 = scalar_lea.sflag [#allocation5], %s1303
          %s1305 = sand.u32 %s339, 1
          %s1306 = scalar_lea.vmem [#allocation6], %s1305
          %1307 = dma.done %s1304, 16
        $region92: #{tpu_custom_call.1} parent=87 // pred_fallthru
          _
      $region88: #{tpu_custom_call.1} parent=5 // pred_fallthru
        _
    $region6: #{tpu_custom_call.1} parent=1 // loop_footer
      %s30 = sadd.s32 1, %s26
    $region7: #{tpu_custom_call.1} parent=1 // loop_footer_branch
      %25 = sbr.rel target = $region3
    $region8: #{tpu_custom_call.1} parent=1 // loop_exit
      _
    %1308 = vsyncpa [#allocation4], 1
    %s1309 = scalar_lea.sflag [#allocation4], 1
    %1310 = vsyncpa %s1309, 1
    %1311 = vsyncpa [#allocation5], 1
    %s1312 = scalar_lea.sflag [#allocation5], 1
    %1313 = vsyncpa %s1312, 1

</llo_original>
